<compile_context>
chip_gen: v6e
topology: v6e:2x2x1
jax: 0.10.0
libtpu: 0.0.40
codegen_flags: <defaults>
</compile_context>

<pallas_src>
import functools

import jax
import jax.numpy as jnp
from jax.experimental import pallas as pl
from jax.experimental.pallas import tpu as pltpu


def _encoder_kernel(n_layers, L, B, H, emb_ref, wih0_ref, whh0_ref, b0_ref, *rest):
    # rest = [w_cat_1, b_1, ..., w_cat_{n_layers-1}, b_{n_layers-1}, hid_ref, cell_ref, xproj_ref]
    n_deep = n_layers - 1
    deep = [(rest[2 * i], rest[2 * i + 1]) for i in range(n_deep)]
    hid_ref = rest[2 * n_deep]
    cell_ref = rest[2 * n_deep + 1]
    xproj_ref = rest[2 * n_deep + 2]

    wdtype = wih0_ref.dtype

    # ---- Preamble: layer-0 input projection for ALL timesteps as ONE MXU matmul (+ bias). ----
    x_all = emb_ref[...]  # [L*B, E], already gathered/padded by the wrapper
    xproj_ref[...] = (
        jnp.dot(x_all.astype(wdtype), wih0_ref[...], preferred_element_type=jnp.float32)
        + b0_ref[...]
    )

    def gate_act(gates, c_prev):
        # 2 full-tile EUP ops over the lane-dense [B, 4H] gate tile (instead of 4 quarter-tile).
        sig = jax.nn.sigmoid(gates)
        th = jnp.tanh(gates)
        gi = sig[:, 0 * H:1 * H]
        gf = sig[:, 1 * H:2 * H]
        gg = th[:, 2 * H:3 * H]
        go = sig[:, 3 * H:4 * H]
        c = gf * c_prev + gi * gg
        h = go * jnp.tanh(c)
        return h, c

    def step(t, carry):
        hs, cs = carry  # tuples of [B, H] f32 (register-resident recurrent state)
        row = pl.multiple_of(t * B, 8)

        # Layer 0: input projection already precomputed -> only the recurrent matmul remains.
        gates0 = xproj_ref[pl.ds(row, B), :] + jnp.dot(
            hs[0].astype(wdtype), whh0_ref[...], preferred_element_type=jnp.float32
        )
        h, c = gate_act(gates0, cs[0])
        new_hs = [h]
        new_cs = [c]
        x = h

        # Deeper layers: single fused dot per layer ([x, h_prev] @ [W_ih; W_hh]).
        for l, (wcat_ref, b_ref) in enumerate(deep, start=1):
            xh = jnp.concatenate([x, hs[l]], axis=-1)  # [B, 2H]
            gates = (
                jnp.dot(xh.astype(wdtype), wcat_ref[...], preferred_element_type=jnp.float32)
                + b_ref[...]
            )
            h, c = gate_act(gates, cs[l])
            new_hs.append(h)
            new_cs.append(c)
            x = h

        return tuple(new_hs), tuple(new_cs)

    zero = jnp.zeros((B, H), jnp.float32)
    init = (tuple(zero for _ in range(n_layers)), tuple(zero for _ in range(n_layers)))
    hs, cs = jax.lax.fori_loop(0, L, step, init, unroll=True)

    # ---- Finalize: single HBM writeback of (hidden, cell). ----
    hid_ref[...] = jnp.stack(hs).astype(hid_ref.dtype)
    cell_ref[...] = jnp.stack(cs).astype(cell_ref.dtype)


def encoder_forward(params, src):
    """Pallas equivalent of Encoder.forward(src).  src: [seq_len, batch] int token ids."""
    n_layers = len(params["lstm"])
    L, B = src.shape
    table = params["embedding"]
    V, E = table.shape
    H = params["lstm"][0]["w_hh_t"].shape[0]  # w_hh^T is [H, 4H]

    # Pad batch to a full sublane tile (multiple of 8) so vregs / MXU-M are fully used.
    B_pad = ((B + 7) // 8) * 8
    ids = jnp.clip(src.astype(jnp.int32), 0, V - 1)
    if B_pad != B:
        ids = jnp.pad(ids, ((0, 0), (0, B_pad - B)))  # pad with token 0 (independent columns)

    # Embedding lookup hoisted to XLA (tiny table gather), flattened to [L*B_pad, E].
    # TODO(synk): nn.Dropout on `embedded` and the LSTM inter-layer dropout are reproduced in
    # eval mode only (identity); training-mode RNG dropout is not implemented.
    emb = table[ids].reshape(L * B_pad, E)

    lstm0 = params["lstm"][0]
    inputs = [emb, lstm0["w_ih_t"], lstm0["w_hh_t"], lstm0["b"]]
    for lp in params["lstm"][1:]:
        inputs += [lp["w_cat"], lp["b"]]

    out_shape = (
        jax.ShapeDtypeStruct((n_layers, B_pad, H), jnp.float32),  # hidden
        jax.ShapeDtypeStruct((n_layers, B_pad, H), jnp.float32),  # cell
    )

    kernel = functools.partial(_encoder_kernel, n_layers, L, B_pad, H)
    hid, cell = pl.pallas_call(
        kernel,
        out_shape=out_shape,
        # Single invocation (no grid): everything fits in VMEM; the recurrence runs in an
        # in-kernel fori_loop so there is no per-timestep grid/pipeline overhead.
        scratch_shapes=[pltpu.VMEM((L * B_pad, 4 * H), jnp.float32)],  # precomputed layer-0 proj
    )(*inputs)

    return hid[:, :B, :], cell[:, :B, :]


def init_raw_params(key, input_dim, emb_dim, hid_dim, n_layers):
    """Deterministic parameters with the same shapes/layout as the PyTorch module."""
    keys = iter(jax.random.split(key, 1 + 4 * n_layers))
    raw = {
        "embedding": 0.1 * jax.random.normal(next(keys), (input_dim, emb_dim), jnp.float32),
        "lstm": [],
    }
    in_dim = emb_dim
    for _ in range(n_layers):
        raw["lstm"].append(
            dict(
                w_ih=0.1 * jax.random.normal(next(keys), (4 * hid_dim, in_dim), jnp.float32),
                w_hh=0.1 * jax.random.normal(next(keys), (4 * hid_dim, hid_dim), jnp.float32),
                b_ih=0.1 * jax.random.normal(next(keys), (4 * hid_dim,), jnp.float32),
                b_hh=0.1 * jax.random.normal(next(keys), (4 * hid_dim,), jnp.float32),
            )
        )
        in_dim = hid_dim
    return raw


def pack_kernel_params(raw, weight_dtype=jnp.float32):
    """PyTorch-layout weights -> kernel layout.

    Layer 0 keeps W_ih^T / W_hh^T separate (input projection is precomputed for all timesteps);
    deeper layers pack [W_ih^T; W_hh^T] into one fused [(in_dim+H), 4H] weight.  Biases are
    combined (b_ih + b_hh) and kept f32.  weight_dtype=jnp.bfloat16 halves weight VMEM and feeds
    the v6e/v7x bf16 MXU; accumulation stays f32 inside the kernel.
    """
    l0 = raw["lstm"][0]
    packed = {
        "embedding": raw["embedding"].astype(weight_dtype),
        "lstm": [
            dict(
                w_ih_t=l0["w_ih"].T.astype(weight_dtype),                         # [E, 4H]
                w_hh_t=l0["w_hh"].T.astype(weight_dtype),                         # [H, 4H]
                b=(l0["b_ih"] + l0["b_hh"]).reshape(1, -1).astype(jnp.float32),   # [1, 4H]
            )
        ],
    }
    for lp in raw["lstm"][1:]:
        packed["lstm"].append(
            dict(
                w_cat=jnp.concatenate([lp["w_ih"].T, lp["w_hh"].T], axis=0).astype(weight_dtype),  # [2H, 4H]
                b=(lp["b_ih"] + lp["b_hh"]).reshape(1, -1).astype(jnp.float32),                    # [1, 4H]
            )
        )
    return packed


def encoder_reference(raw, src, hid_dim):
    """Pure-JAX reference reproducing the PyTorch math (zero initial state, eval-mode dropout)."""
    L, B = src.shape
    layer_in = raw["embedding"][src]  # [L, B, E]
    hs, cs = [], []
    for lp in raw["lstm"]:
        h_t = jnp.zeros((B, hid_dim), jnp.float32)
        c_t = jnp.zeros((B, hid_dim), jnp.float32)
        outs = []
        for t in range(L):
            gates = (layer_in[t] @ lp["w_ih"].T + lp["b_ih"]
                     + h_t @ lp["w_hh"].T + lp["b_hh"])
            gi, gf, gg, go = jnp.split(gates, 4, axis=-1)
            c_t = jax.nn.sigmoid(gf) * c_t + jax.nn.sigmoid(gi) * jnp.tanh(gg)
            h_t = jax.nn.sigmoid(go) * jnp.tanh(c_t)
            outs.append(h_t)
        layer_in = jnp.stack(outs)
        hs.append(h_t)
        cs.append(c_t)
    return jnp.stack(hs), jnp.stack(cs)


if __name__ == "__main__":
    INPUT_DIM, EMB_DIM, HID_DIM, N_LAYERS, DROPOUT = 32, 16, 32, 2, 0.5  # dropout: eval-mode identity
    SEQ_LEN, BATCH = 8, 4

    key = jax.random.PRNGKey(0)
    k_par, k_ids = jax.random.split(key)
    raw = init_raw_params(k_par, INPUT_DIM, EMB_DIM, HID_DIM, N_LAYERS)
    src = jax.random.randint(k_ids, (SEQ_LEN, BATCH), 0, INPUT_DIM, dtype=jnp.int32)

    hid_r, cell_r = encoder_reference(raw, src, HID_DIM)

    # --- float32 weights: near-exact-math check ---
    params_f32 = pack_kernel_params(raw, weight_dtype=jnp.float32)
    hid, cell = encoder_forward(params_f32, src)
    jax.block_until_ready((hid, cell))
    assert hid.shape == (N_LAYERS, BATCH, HID_DIM)
    assert cell.shape == (N_LAYERS, BATCH, HID_DIM)
    assert jnp.allclose(hid, hid_r, atol=1e-4), "hidden mismatch (f32)"
    assert jnp.allclose(cell, cell_r, atol=1e-4), "cell mismatch (f32)"

    # --- bfloat16 weights (v6e/v7x MXU path): looser tolerance for weight rounding ---
    params_bf16 = pack_kernel_params(raw, weight_dtype=jnp.bfloat16)
    hid_b, cell_b = encoder_forward(params_bf16, src)
    jax.block_until_ready((hid_b, cell_b))
    assert jnp.allclose(hid_b, hid_r, atol=5e-2), "hidden mismatch (bf16)"
    assert jnp.allclose(cell_b, cell_r, atol=5e-2), "cell mismatch (bf16)"

    print("KERNEL_OK")
</pallas_src>

<mosaic_0001>
module attributes {stable_mosaic.version = 11 : i64} {
  func.func @_encoder_kernel(%arg0: memref<64x16xf32, #tpu.memory_space<vmem>>, %arg1: memref<16x128xf32, #tpu.memory_space<vmem>>, %arg2: memref<32x128xf32, #tpu.memory_space<vmem>>, %arg3: memref<1x128xf32, #tpu.memory_space<vmem>>, %arg4: memref<64x128xf32, #tpu.memory_space<vmem>>, %arg5: memref<1x128xf32, #tpu.memory_space<vmem>>, %arg6: memref<2x8x32xf32, #tpu.memory_space<vmem>>, %arg7: memref<2x8x32xf32, #tpu.memory_space<vmem>>, %arg8: memref<64x128xf32, #tpu.memory_space<vmem>>) attributes {dimension_semantics = [], scalar_prefetch = 0 : i64, scratch_operands = 1 : i64, tpu.core_type = #tpu.core_type<tc>} {
    %c0 = arith.constant 0 : index
    %c0_0 = arith.constant 0 : index
    %0 = vector.load %arg0[%c0, %c0_0] : memref<64x16xf32, #tpu.memory_space<vmem>>, vector<64x16xf32>
    %c0_1 = arith.constant 0 : index
    %c0_2 = arith.constant 0 : index
    %1 = vector.load %arg1[%c0_1, %c0_2] : memref<16x128xf32, #tpu.memory_space<vmem>>, vector<16x128xf32>
    %cst = arith.constant dense<0.000000e+00> : vector<64x128xf32>
    %2 = tpu.matmul %0, %1, %cst {dimension_numbers = #tpu.dot_dimension_numbers<[1], [0], [0], [1], [0, 0, 1, 1], [], []>} : vector<64x16xf32>, vector<16x128xf32>, vector<64x128xf32> -> vector<64x128xf32>
    %c0_3 = arith.constant 0 : index
    %c0_4 = arith.constant 0 : index
    %3 = vector.load %arg3[%c0_3, %c0_4] : memref<1x128xf32, #tpu.memory_space<vmem>>, vector<1x128xf32>
    %4 = vector.broadcast %3 : vector<1x128xf32> to vector<64x128xf32>
    %5 = arith.addf %2, %4 : vector<64x128xf32>
    %c0_5 = arith.constant 0 : index
    %c0_6 = arith.constant 0 : index
    %6 = vector.load %arg8[%c0_5, %c0_6] : memref<64x128xf32, #tpu.memory_space<vmem>>, vector<64x128xf32>
    tpu.vector_store %arg8[%c0_5, %c0_6], %5 {strides = array<i32>} : memref<64x128xf32, #tpu.memory_space<vmem>>, vector<64x128xf32>,
    %cst_7 = arith.constant 0.000000e+00 : f32
    %7 = vector.broadcast %cst_7 : f32 to vector<8x32xf32>
    %c0_i32 = arith.constant 0 : i32
    %c8_i32 = arith.constant 8 : i32
    %8 = arith.muli %c0_i32, %c8_i32 : i32
    %9 = tpu.assume_multiple %8, 8 : i32
    %10 = arith.index_cast %9 : i32 to index
    %c0_8 = arith.constant 0 : index
    %11 = vector.load %arg8[%10, %c0_8] : memref<64x128xf32, #tpu.memory_space<vmem>>, vector<8x128xf32>
    %c0_9 = arith.constant 0 : index
    %c0_10 = arith.constant 0 : index
    %12 = vector.load %arg2[%c0_9, %c0_10] : memref<32x128xf32, #tpu.memory_space<vmem>>, vector<32x128xf32>
    %cst_11 = arith.constant dense<0.000000e+00> : vector<8x128xf32>
    %13 = tpu.matmul %7, %12, %cst_11 {dimension_numbers = #tpu.dot_dimension_numbers<[1], [0], [0], [1], [0, 0, 1, 1], [], []>} : vector<8x32xf32>, vector<32x128xf32>, vector<8x128xf32> -> vector<8x128xf32>
    %14 = arith.addf %11, %13 : vector<8x128xf32>
    %15 = arith.negf %14 : vector<8x128xf32>
    %16 = math.exp %15 : vector<8x128xf32>
    %cst_12 = arith.constant 1.000000e+00 : f32
    %17 = vector.broadcast %cst_12 : f32 to vector<8x128xf32>
    %18 = arith.addf %17, %16 : vector<8x128xf32>
    %19 = arith.divf %17, %18 : vector<8x128xf32>
    %20 = math.tanh %14 : vector<8x128xf32>
    %21 = vector.extract_strided_slice %19 {offsets = [0, 0], sizes = [8, 32], strides = [1, 1]} : vector<8x128xf32> to vector<8x32xf32>
    %22 = vector.extract_strided_slice %19 {offsets = [0, 32], sizes = [8, 32], strides = [1, 1]} : vector<8x128xf32> to vector<8x32xf32>
    %23 = vector.extract_strided_slice %20 {offsets = [0, 64], sizes = [8, 32], strides = [1, 1]} : vector<8x128xf32> to vector<8x32xf32>
    %24 = vector.extract_strided_slice %19 {offsets = [0, 96], sizes = [8, 32], strides = [1, 1]} : vector<8x128xf32> to vector<8x32xf32>
    %25 = arith.mulf %22, %7 : vector<8x32xf32>
    %26 = arith.mulf %21, %23 : vector<8x32xf32>
    %27 = arith.addf %25, %26 : vector<8x32xf32>
    %28 = math.tanh %27 : vector<8x32xf32>
    %29 = arith.mulf %24, %28 : vector<8x32xf32>
    %30 = tpu.concatenate %29, %7 in 1 : vector<8x32xf32>, vector<8x32xf32> -> vector<8x64xf32>
    %c0_13 = arith.constant 0 : index
    %c0_14 = arith.constant 0 : index
    %31 = vector.load %arg4[%c0_13, %c0_14] : memref<64x128xf32, #tpu.memory_space<vmem>>, vector<64x128xf32>
    %cst_15 = arith.constant dense<0.000000e+00> : vector<8x128xf32>
    %32 = tpu.matmul %30, %31, %cst_15 {dimension_numbers = #tpu.dot_dimension_numbers<[1], [0], [0], [1], [0, 0, 1, 1], [], []>} : vector<8x64xf32>, vector<64x128xf32>, vector<8x128xf32> -> vector<8x128xf32>
    %c0_16 = arith.constant 0 : index
    %c0_17 = arith.constant 0 : index
    %33 = vector.load %arg5[%c0_16, %c0_17] : memref<1x128xf32, #tpu.memory_space<vmem>>, vector<1x128xf32>
    %34 = vector.broadcast %33 : vector<1x128xf32> to vector<8x128xf32>
    %35 = arith.addf %32, %34 : vector<8x128xf32>
    %36 = arith.negf %35 : vector<8x128xf32>
    %37 = math.exp %36 : vector<8x128xf32>
    %cst_18 = arith.constant 1.000000e+00 : f32
    %38 = vector.broadcast %cst_18 : f32 to vector<8x128xf32>
    %39 = arith.addf %38, %37 : vector<8x128xf32>
    %40 = arith.divf %38, %39 : vector<8x128xf32>
    %41 = math.tanh %35 : vector<8x128xf32>
    %42 = vector.extract_strided_slice %40 {offsets = [0, 0], sizes = [8, 32], strides = [1, 1]} : vector<8x128xf32> to vector<8x32xf32>
    %43 = vector.extract_strided_slice %40 {offsets = [0, 32], sizes = [8, 32], strides = [1, 1]} : vector<8x128xf32> to vector<8x32xf32>
    %44 = vector.extract_strided_slice %41 {offsets = [0, 64], sizes = [8, 32], strides = [1, 1]} : vector<8x128xf32> to vector<8x32xf32>
    %45 = vector.extract_strided_slice %40 {offsets = [0, 96], sizes = [8, 32], strides = [1, 1]} : vector<8x128xf32> to vector<8x32xf32>
    %46 = arith.mulf %43, %7 : vector<8x32xf32>
    %47 = arith.mulf %42, %44 : vector<8x32xf32>
    %48 = arith.addf %46, %47 : vector<8x32xf32>
    %49 = math.tanh %48 : vector<8x32xf32>
    %50 = arith.mulf %45, %49 : vector<8x32xf32>
    %c1_i32 = arith.constant 1 : i32
    %c8_i32_19 = arith.constant 8 : i32
    %51 = arith.muli %c1_i32, %c8_i32_19 : i32
    %52 = tpu.assume_multiple %51, 8 : i32
    %53 = arith.index_cast %52 : i32 to index
    %c0_20 = arith.constant 0 : index
    %54 = vector.load %arg8[%53, %c0_20] : memref<64x128xf32, #tpu.memory_space<vmem>>, vector<8x128xf32>
    %c0_21 = arith.constant 0 : index
    %c0_22 = arith.constant 0 : index
    %55 = vector.load %arg2[%c0_21, %c0_22] : memref<32x128xf32, #tpu.memory_space<vmem>>, vector<32x128xf32>
    %cst_23 = arith.constant dense<0.000000e+00> : vector<8x128xf32>
    %56 = tpu.matmul %29, %55, %cst_23 {dimension_numbers = #tpu.dot_dimension_numbers<[1], [0], [0], [1], [0, 0, 1, 1], [], []>} : vector<8x32xf32>, vector<32x128xf32>, vector<8x128xf32> -> vector<8x128xf32>
    %57 = arith.addf %54, %56 : vector<8x128xf32>
    %58 = arith.negf %57 : vector<8x128xf32>
    %59 = math.exp %58 : vector<8x128xf32>
    %cst_24 = arith.constant 1.000000e+00 : f32
    %60 = vector.broadcast %cst_24 : f32 to vector<8x128xf32>
    %61 = arith.addf %60, %59 : vector<8x128xf32>
    %62 = arith.divf %60, %61 : vector<8x128xf32>
    %63 = math.tanh %57 : vector<8x128xf32>
    %64 = vector.extract_strided_slice %62 {offsets = [0, 0], sizes = [8, 32], strides = [1, 1]} : vector<8x128xf32> to vector<8x32xf32>
    %65 = vector.extract_strided_slice %62 {offsets = [0, 32], sizes = [8, 32], strides = [1, 1]} : vector<8x128xf32> to vector<8x32xf32>
    %66 = vector.extract_strided_slice %63 {offsets = [0, 64], sizes = [8, 32], strides = [1, 1]} : vector<8x128xf32> to vector<8x32xf32>
    %67 = vector.extract_strided_slice %62 {offsets = [0, 96], sizes = [8, 32], strides = [1, 1]} : vector<8x128xf32> to vector<8x32xf32>
    %68 = arith.mulf %65, %27 : vector<8x32xf32>
    %69 = arith.mulf %64, %66 : vector<8x32xf32>
    %70 = arith.addf %68, %69 : vector<8x32xf32>
    %71 = math.tanh %70 : vector<8x32xf32>
    %72 = arith.mulf %67, %71 : vector<8x32xf32>
    %73 = tpu.concatenate %72, %50 in 1 : vector<8x32xf32>, vector<8x32xf32> -> vector<8x64xf32>
    %c0_25 = arith.constant 0 : index
    %c0_26 = arith.constant 0 : index
    %74 = vector.load %arg4[%c0_25, %c0_26] : memref<64x128xf32, #tpu.memory_space<vmem>>, vector<64x128xf32>
    %cst_27 = arith.constant dense<0.000000e+00> : vector<8x128xf32>
    %75 = tpu.matmul %73, %74, %cst_27 {dimension_numbers = #tpu.dot_dimension_numbers<[1], [0], [0], [1], [0, 0, 1, 1], [], []>} : vector<8x64xf32>, vector<64x128xf32>, vector<8x128xf32> -> vector<8x128xf32>
    %c0_28 = arith.constant 0 : index
    %c0_29 = arith.constant 0 : index
    %76 = vector.load %arg5[%c0_28, %c0_29] : memref<1x128xf32, #tpu.memory_space<vmem>>, vector<1x128xf32>
    %77 = vector.broadcast %76 : vector<1x128xf32> to vector<8x128xf32>
    %78 = arith.addf %75, %77 : vector<8x128xf32>
    %79 = arith.negf %78 : vector<8x128xf32>
    %80 = math.exp %79 : vector<8x128xf32>
    %cst_30 = arith.constant 1.000000e+00 : f32
    %81 = vector.broadcast %cst_30 : f32 to vector<8x128xf32>
    %82 = arith.addf %81, %80 : vector<8x128xf32>
    %83 = arith.divf %81, %82 : vector<8x128xf32>
    %84 = math.tanh %78 : vector<8x128xf32>
    %85 = vector.extract_strided_slice %83 {offsets = [0, 0], sizes = [8, 32], strides = [1, 1]} : vector<8x128xf32> to vector<8x32xf32>
    %86 = vector.extract_strided_slice %83 {offsets = [0, 32], sizes = [8, 32], strides = [1, 1]} : vector<8x128xf32> to vector<8x32xf32>
    %87 = vector.extract_strided_slice %84 {offsets = [0, 64], sizes = [8, 32], strides = [1, 1]} : vector<8x128xf32> to vector<8x32xf32>
    %88 = vector.extract_strided_slice %83 {offsets = [0, 96], sizes = [8, 32], strides = [1, 1]} : vector<8x128xf32> to vector<8x32xf32>
    %89 = arith.mulf %86, %48 : vector<8x32xf32>
    %90 = arith.mulf %85, %87 : vector<8x32xf32>
    %91 = arith.addf %89, %90 : vector<8x32xf32>
    %92 = math.tanh %91 : vector<8x32xf32>
    %93 = arith.mulf %88, %92 : vector<8x32xf32>
    %c2_i32 = arith.constant 2 : i32
    %c8_i32_31 = arith.constant 8 : i32
    %94 = arith.muli %c2_i32, %c8_i32_31 : i32
    %95 = tpu.assume_multiple %94, 8 : i32
    %96 = arith.index_cast %95 : i32 to index
    %c0_32 = arith.constant 0 : index
    %97 = vector.load %arg8[%96, %c0_32] : memref<64x128xf32, #tpu.memory_space<vmem>>, vector<8x128xf32>
    %c0_33 = arith.constant 0 : index
    %c0_34 = arith.constant 0 : index
    %98 = vector.load %arg2[%c0_33, %c0_34] : memref<32x128xf32, #tpu.memory_space<vmem>>, vector<32x128xf32>
    %cst_35 = arith.constant dense<0.000000e+00> : vector<8x128xf32>
    %99 = tpu.matmul %72, %98, %cst_35 {dimension_numbers = #tpu.dot_dimension_numbers<[1], [0], [0], [1], [0, 0, 1, 1], [], []>} : vector<8x32xf32>, vector<32x128xf32>, vector<8x128xf32> -> vector<8x128xf32>
    %100 = arith.addf %97, %99 : vector<8x128xf32>
    %101 = arith.negf %100 : vector<8x128xf32>
    %102 = math.exp %101 : vector<8x128xf32>
    %cst_36 = arith.constant 1.000000e+00 : f32
    %103 = vector.broadcast %cst_36 : f32 to vector<8x128xf32>
    %104 = arith.addf %103, %102 : vector<8x128xf32>
    %105 = arith.divf %103, %104 : vector<8x128xf32>
    %106 = math.tanh %100 : vector<8x128xf32>
    %107 = vector.extract_strided_slice %105 {offsets = [0, 0], sizes = [8, 32], strides = [1, 1]} : vector<8x128xf32> to vector<8x32xf32>
    %108 = vector.extract_strided_slice %105 {offsets = [0, 32], sizes = [8, 32], strides = [1, 1]} : vector<8x128xf32> to vector<8x32xf32>
    %109 = vector.extract_strided_slice %106 {offsets = [0, 64], sizes = [8, 32], strides = [1, 1]} : vector<8x128xf32> to vector<8x32xf32>
    %110 = vector.extract_strided_slice %105 {offsets = [0, 96], sizes = [8, 32], strides = [1, 1]} : vector<8x128xf32> to vector<8x32xf32>
    %111 = arith.mulf %108, %70 : vector<8x32xf32>
    %112 = arith.mulf %107, %109 : vector<8x32xf32>
    %113 = arith.addf %111, %112 : vector<8x32xf32>
    %114 = math.tanh %113 : vector<8x32xf32>
    %115 = arith.mulf %110, %114 : vector<8x32xf32>
    %116 = tpu.concatenate %115, %93 in 1 : vector<8x32xf32>, vector<8x32xf32> -> vector<8x64xf32>
    %c0_37 = arith.constant 0 : index
    %c0_38 = arith.constant 0 : index
    %117 = vector.load %arg4[%c0_37, %c0_38] : memref<64x128xf32, #tpu.memory_space<vmem>>, vector<64x128xf32>
    %cst_39 = arith.constant dense<0.000000e+00> : vector<8x128xf32>
    %118 = tpu.matmul %116, %117, %cst_39 {dimension_numbers = #tpu.dot_dimension_numbers<[1], [0], [0], [1], [0, 0, 1, 1], [], []>} : vector<8x64xf32>, vector<64x128xf32>, vector<8x128xf32> -> vector<8x128xf32>
    %c0_40 = arith.constant 0 : index
    %c0_41 = arith.constant 0 : index
    %119 = vector.load %arg5[%c0_40, %c0_41] : memref<1x128xf32, #tpu.memory_space<vmem>>, vector<1x128xf32>
    %120 = vector.broadcast %119 : vector<1x128xf32> to vector<8x128xf32>
    %121 = arith.addf %118, %120 : vector<8x128xf32>
    %122 = arith.negf %121 : vector<8x128xf32>
    %123 = math.exp %122 : vector<8x128xf32>
    %cst_42 = arith.constant 1.000000e+00 : f32
    %124 = vector.broadcast %cst_42 : f32 to vector<8x128xf32>
    %125 = arith.addf %124, %123 : vector<8x128xf32>
    %126 = arith.divf %124, %125 : vector<8x128xf32>
    %127 = math.tanh %121 : vector<8x128xf32>
    %128 = vector.extract_strided_slice %126 {offsets = [0, 0], sizes = [8, 32], strides = [1, 1]} : vector<8x128xf32> to vector<8x32xf32>
    %129 = vector.extract_strided_slice %126 {offsets = [0, 32], sizes = [8, 32], strides = [1, 1]} : vector<8x128xf32> to vector<8x32xf32>
    %130 = vector.extract_strided_slice %127 {offsets = [0, 64], sizes = [8, 32], strides = [1, 1]} : vector<8x128xf32> to vector<8x32xf32>
    %131 = vector.extract_strided_slice %126 {offsets = [0, 96], sizes = [8, 32], strides = [1, 1]} : vector<8x128xf32> to vector<8x32xf32>
    %132 = arith.mulf %129, %91 : vector<8x32xf32>
    %133 = arith.mulf %128, %130 : vector<8x32xf32>
    %134 = arith.addf %132, %133 : vector<8x32xf32>
    %135 = math.tanh %134 : vector<8x32xf32>
    %136 = arith.mulf %131, %135 : vector<8x32xf32>
    %c3_i32 = arith.constant 3 : i32
    %c8_i32_43 = arith.constant 8 : i32
    %137 = arith.muli %c3_i32, %c8_i32_43 : i32
    %138 = tpu.assume_multiple %137, 8 : i32
    %139 = arith.index_cast %138 : i32 to index
    %c0_44 = arith.constant 0 : index
    %140 = vector.load %arg8[%139, %c0_44] : memref<64x128xf32, #tpu.memory_space<vmem>>, vector<8x128xf32>
    %c0_45 = arith.constant 0 : index
    %c0_46 = arith.constant 0 : index
    %141 = vector.load %arg2[%c0_45, %c0_46] : memref<32x128xf32, #tpu.memory_space<vmem>>, vector<32x128xf32>
    %cst_47 = arith.constant dense<0.000000e+00> : vector<8x128xf32>
    %142 = tpu.matmul %115, %141, %cst_47 {dimension_numbers = #tpu.dot_dimension_numbers<[1], [0], [0], [1], [0, 0, 1, 1], [], []>} : vector<8x32xf32>, vector<32x128xf32>, vector<8x128xf32> -> vector<8x128xf32>
    %143 = arith.addf %140, %142 : vector<8x128xf32>
    %144 = arith.negf %143 : vector<8x128xf32>
    %145 = math.exp %144 : vector<8x128xf32>
    %cst_48 = arith.constant 1.000000e+00 : f32
    %146 = vector.broadcast %cst_48 : f32 to vector<8x128xf32>
    %147 = arith.addf %146, %145 : vector<8x128xf32>
    %148 = arith.divf %146, %147 : vector<8x128xf32>
    %149 = math.tanh %143 : vector<8x128xf32>
    %150 = vector.extract_strided_slice %148 {offsets = [0, 0], sizes = [8, 32], strides = [1, 1]} : vector<8x128xf32> to vector<8x32xf32>
    %151 = vector.extract_strided_slice %148 {offsets = [0, 32], sizes = [8, 32], strides = [1, 1]} : vector<8x128xf32> to vector<8x32xf32>
    %152 = vector.extract_strided_slice %149 {offsets = [0, 64], sizes = [8, 32], strides = [1, 1]} : vector<8x128xf32> to vector<8x32xf32>
    %153 = vector.extract_strided_slice %148 {offsets = [0, 96], sizes = [8, 32], strides = [1, 1]} : vector<8x128xf32> to vector<8x32xf32>
    %154 = arith.mulf %151, %113 : vector<8x32xf32>
    %155 = arith.mulf %150, %152 : vector<8x32xf32>
    %156 = arith.addf %154, %155 : vector<8x32xf32>
    %157 = math.tanh %156 : vector<8x32xf32>
    %158 = arith.mulf %153, %157 : vector<8x32xf32>
    %159 = tpu.concatenate %158, %136 in 1 : vector<8x32xf32>, vector<8x32xf32> -> vector<8x64xf32>
    %c0_49 = arith.constant 0 : index
    %c0_50 = arith.constant 0 : index
    %160 = vector.load %arg4[%c0_49, %c0_50] : memref<64x128xf32, #tpu.memory_space<vmem>>, vector<64x128xf32>
    %cst_51 = arith.constant dense<0.000000e+00> : vector<8x128xf32>
    %161 = tpu.matmul %159, %160, %cst_51 {dimension_numbers = #tpu.dot_dimension_numbers<[1], [0], [0], [1], [0, 0, 1, 1], [], []>} : vector<8x64xf32>, vector<64x128xf32>, vector<8x128xf32> -> vector<8x128xf32>
    %c0_52 = arith.constant 0 : index
    %c0_53 = arith.constant 0 : index
    %162 = vector.load %arg5[%c0_52, %c0_53] : memref<1x128xf32, #tpu.memory_space<vmem>>, vector<1x128xf32>
    %163 = vector.broadcast %162 : vector<1x128xf32> to vector<8x128xf32>
    %164 = arith.addf %161, %163 : vector<8x128xf32>
    %165 = arith.negf %164 : vector<8x128xf32>
    %166 = math.exp %165 : vector<8x128xf32>
    %cst_54 = arith.constant 1.000000e+00 : f32
    %167 = vector.broadcast %cst_54 : f32 to vector<8x128xf32>
    %168 = arith.addf %167, %166 : vector<8x128xf32>
    %169 = arith.divf %167, %168 : vector<8x128xf32>
    %170 = math.tanh %164 : vector<8x128xf32>
    %171 = vector.extract_strided_slice %169 {offsets = [0, 0], sizes = [8, 32], strides = [1, 1]} : vector<8x128xf32> to vector<8x32xf32>
    %172 = vector.extract_strided_slice %169 {offsets = [0, 32], sizes = [8, 32], strides = [1, 1]} : vector<8x128xf32> to vector<8x32xf32>
    %173 = vector.extract_strided_slice %170 {offsets = [0, 64], sizes = [8, 32], strides = [1, 1]} : vector<8x128xf32> to vector<8x32xf32>
    %174 = vector.extract_strided_slice %169 {offsets = [0, 96], sizes = [8, 32], strides = [1, 1]} : vector<8x128xf32> to vector<8x32xf32>
    %175 = arith.mulf %172, %134 : vector<8x32xf32>
    %176 = arith.mulf %171, %173 : vector<8x32xf32>
    %177 = arith.addf %175, %176 : vector<8x32xf32>
    %178 = math.tanh %177 : vector<8x32xf32>
    %179 = arith.mulf %174, %178 : vector<8x32xf32>
    %c4_i32 = arith.constant 4 : i32
    %c8_i32_55 = arith.constant 8 : i32
    %180 = arith.muli %c4_i32, %c8_i32_55 : i32
    %181 = tpu.assume_multiple %180, 8 : i32
    %182 = arith.index_cast %181 : i32 to index
    %c0_56 = arith.constant 0 : index
    %183 = vector.load %arg8[%182, %c0_56] : memref<64x128xf32, #tpu.memory_space<vmem>>, vector<8x128xf32>
    %c0_57 = arith.constant 0 : index
    %c0_58 = arith.constant 0 : index
    %184 = vector.load %arg2[%c0_57, %c0_58] : memref<32x128xf32, #tpu.memory_space<vmem>>, vector<32x128xf32>
    %cst_59 = arith.constant dense<0.000000e+00> : vector<8x128xf32>
    %185 = tpu.matmul %158, %184, %cst_59 {dimension_numbers = #tpu.dot_dimension_numbers<[1], [0], [0], [1], [0, 0, 1, 1], [], []>} : vector<8x32xf32>, vector<32x128xf32>, vector<8x128xf32> -> vector<8x128xf32>
    %186 = arith.addf %183, %185 : vector<8x128xf32>
    %187 = arith.negf %186 : vector<8x128xf32>
    %188 = math.exp %187 : vector<8x128xf32>
    %cst_60 = arith.constant 1.000000e+00 : f32
    %189 = vector.broadcast %cst_60 : f32 to vector<8x128xf32>
    %190 = arith.addf %189, %188 : vector<8x128xf32>
    %191 = arith.divf %189, %190 : vector<8x128xf32>
    %192 = math.tanh %186 : vector<8x128xf32>
    %193 = vector.extract_strided_slice %191 {offsets = [0, 0], sizes = [8, 32], strides = [1, 1]} : vector<8x128xf32> to vector<8x32xf32>
    %194 = vector.extract_strided_slice %191 {offsets = [0, 32], sizes = [8, 32], strides = [1, 1]} : vector<8x128xf32> to vector<8x32xf32>
    %195 = vector.extract_strided_slice %192 {offsets = [0, 64], sizes = [8, 32], strides = [1, 1]} : vector<8x128xf32> to vector<8x32xf32>
    %196 = vector.extract_strided_slice %191 {offsets = [0, 96], sizes = [8, 32], strides = [1, 1]} : vector<8x128xf32> to vector<8x32xf32>
    %197 = arith.mulf %194, %156 : vector<8x32xf32>
    %198 = arith.mulf %193, %195 : vector<8x32xf32>
    %199 = arith.addf %197, %198 : vector<8x32xf32>
    %200 = math.tanh %199 : vector<8x32xf32>
    %201 = arith.mulf %196, %200 : vector<8x32xf32>
    %202 = tpu.concatenate %201, %179 in 1 : vector<8x32xf32>, vector<8x32xf32> -> vector<8x64xf32>
    %c0_61 = arith.constant 0 : index
    %c0_62 = arith.constant 0 : index
    %203 = vector.load %arg4[%c0_61, %c0_62] : memref<64x128xf32, #tpu.memory_space<vmem>>, vector<64x128xf32>
    %cst_63 = arith.constant dense<0.000000e+00> : vector<8x128xf32>
    %204 = tpu.matmul %202, %203, %cst_63 {dimension_numbers = #tpu.dot_dimension_numbers<[1], [0], [0], [1], [0, 0, 1, 1], [], []>} : vector<8x64xf32>, vector<64x128xf32>, vector<8x128xf32> -> vector<8x128xf32>
    %c0_64 = arith.constant 0 : index
    %c0_65 = arith.constant 0 : index
    %205 = vector.load %arg5[%c0_64, %c0_65] : memref<1x128xf32, #tpu.memory_space<vmem>>, vector<1x128xf32>
    %206 = vector.broadcast %205 : vector<1x128xf32> to vector<8x128xf32>
    %207 = arith.addf %204, %206 : vector<8x128xf32>
    %208 = arith.negf %207 : vector<8x128xf32>
    %209 = math.exp %208 : vector<8x128xf32>
    %cst_66 = arith.constant 1.000000e+00 : f32
    %210 = vector.broadcast %cst_66 : f32 to vector<8x128xf32>
    %211 = arith.addf %210, %209 : vector<8x128xf32>
    %212 = arith.divf %210, %211 : vector<8x128xf32>
    %213 = math.tanh %207 : vector<8x128xf32>
    %214 = vector.extract_strided_slice %212 {offsets = [0, 0], sizes = [8, 32], strides = [1, 1]} : vector<8x128xf32> to vector<8x32xf32>
    %215 = vector.extract_strided_slice %212 {offsets = [0, 32], sizes = [8, 32], strides = [1, 1]} : vector<8x128xf32> to vector<8x32xf32>
    %216 = vector.extract_strided_slice %213 {offsets = [0, 64], sizes = [8, 32], strides = [1, 1]} : vector<8x128xf32> to vector<8x32xf32>
    %217 = vector.extract_strided_slice %212 {offsets = [0, 96], sizes = [8, 32], strides = [1, 1]} : vector<8x128xf32> to vector<8x32xf32>
    %218 = arith.mulf %215, %177 : vector<8x32xf32>
    %219 = arith.mulf %214, %216 : vector<8x32xf32>
    %220 = arith.addf %218, %219 : vector<8x32xf32>
    %221 = math.tanh %220 : vector<8x32xf32>
    %222 = arith.mulf %217, %221 : vector<8x32xf32>
    %c5_i32 = arith.constant 5 : i32
    %c8_i32_67 = arith.constant 8 : i32
    %223 = arith.muli %c5_i32, %c8_i32_67 : i32
    %224 = tpu.assume_multiple %223, 8 : i32
    %225 = arith.index_cast %224 : i32 to index
    %c0_68 = arith.constant 0 : index
    %226 = vector.load %arg8[%225, %c0_68] : memref<64x128xf32, #tpu.memory_space<vmem>>, vector<8x128xf32>
    %c0_69 = arith.constant 0 : index
    %c0_70 = arith.constant 0 : index
    %227 = vector.load %arg2[%c0_69, %c0_70] : memref<32x128xf32, #tpu.memory_space<vmem>>, vector<32x128xf32>
    %cst_71 = arith.constant dense<0.000000e+00> : vector<8x128xf32>
    %228 = tpu.matmul %201, %227, %cst_71 {dimension_numbers = #tpu.dot_dimension_numbers<[1], [0], [0], [1], [0, 0, 1, 1], [], []>} : vector<8x32xf32>, vector<32x128xf32>, vector<8x128xf32> -> vector<8x128xf32>
    %229 = arith.addf %226, %228 : vector<8x128xf32>
    %230 = arith.negf %229 : vector<8x128xf32>
    %231 = math.exp %230 : vector<8x128xf32>
    %cst_72 = arith.constant 1.000000e+00 : f32
    %232 = vector.broadcast %cst_72 : f32 to vector<8x128xf32>
    %233 = arith.addf %232, %231 : vector<8x128xf32>
    %234 = arith.divf %232, %233 : vector<8x128xf32>
    %235 = math.tanh %229 : vector<8x128xf32>
    %236 = vector.extract_strided_slice %234 {offsets = [0, 0], sizes = [8, 32], strides = [1, 1]} : vector<8x128xf32> to vector<8x32xf32>
    %237 = vector.extract_strided_slice %234 {offsets = [0, 32], sizes = [8, 32], strides = [1, 1]} : vector<8x128xf32> to vector<8x32xf32>
    %238 = vector.extract_strided_slice %235 {offsets = [0, 64], sizes = [8, 32], strides = [1, 1]} : vector<8x128xf32> to vector<8x32xf32>
    %239 = vector.extract_strided_slice %234 {offsets = [0, 96], sizes = [8, 32], strides = [1, 1]} : vector<8x128xf32> to vector<8x32xf32>
    %240 = arith.mulf %237, %199 : vector<8x32xf32>
    %241 = arith.mulf %236, %238 : vector<8x32xf32>
    %242 = arith.addf %240, %241 : vector<8x32xf32>
    %243 = math.tanh %242 : vector<8x32xf32>
    %244 = arith.mulf %239, %243 : vector<8x32xf32>
    %245 = tpu.concatenate %244, %222 in 1 : vector<8x32xf32>, vector<8x32xf32> -> vector<8x64xf32>
    %c0_73 = arith.constant 0 : index
    %c0_74 = arith.constant 0 : index
    %246 = vector.load %arg4[%c0_73, %c0_74] : memref<64x128xf32, #tpu.memory_space<vmem>>, vector<64x128xf32>
    %cst_75 = arith.constant dense<0.000000e+00> : vector<8x128xf32>
    %247 = tpu.matmul %245, %246, %cst_75 {dimension_numbers = #tpu.dot_dimension_numbers<[1], [0], [0], [1], [0, 0, 1, 1], [], []>} : vector<8x64xf32>, vector<64x128xf32>, vector<8x128xf32> -> vector<8x128xf32>
    %c0_76 = arith.constant 0 : index
    %c0_77 = arith.constant 0 : index
    %248 = vector.load %arg5[%c0_76, %c0_77] : memref<1x128xf32, #tpu.memory_space<vmem>>, vector<1x128xf32>
    %249 = vector.broadcast %248 : vector<1x128xf32> to vector<8x128xf32>
    %250 = arith.addf %247, %249 : vector<8x128xf32>
    %251 = arith.negf %250 : vector<8x128xf32>
    %252 = math.exp %251 : vector<8x128xf32>
    %cst_78 = arith.constant 1.000000e+00 : f32
    %253 = vector.broadcast %cst_78 : f32 to vector<8x128xf32>
    %254 = arith.addf %253, %252 : vector<8x128xf32>
    %255 = arith.divf %253, %254 : vector<8x128xf32>
    %256 = math.tanh %250 : vector<8x128xf32>
    %257 = vector.extract_strided_slice %255 {offsets = [0, 0], sizes = [8, 32], strides = [1, 1]} : vector<8x128xf32> to vector<8x32xf32>
    %258 = vector.extract_strided_slice %255 {offsets = [0, 32], sizes = [8, 32], strides = [1, 1]} : vector<8x128xf32> to vector<8x32xf32>
    %259 = vector.extract_strided_slice %256 {offsets = [0, 64], sizes = [8, 32], strides = [1, 1]} : vector<8x128xf32> to vector<8x32xf32>
    %260 = vector.extract_strided_slice %255 {offsets = [0, 96], sizes = [8, 32], strides = [1, 1]} : vector<8x128xf32> to vector<8x32xf32>
    %261 = arith.mulf %258, %220 : vector<8x32xf32>
    %262 = arith.mulf %257, %259 : vector<8x32xf32>
    %263 = arith.addf %261, %262 : vector<8x32xf32>
    %264 = math.tanh %263 : vector<8x32xf32>
    %265 = arith.mulf %260, %264 : vector<8x32xf32>
    %c6_i32 = arith.constant 6 : i32
    %c8_i32_79 = arith.constant 8 : i32
    %266 = arith.muli %c6_i32, %c8_i32_79 : i32
    %267 = tpu.assume_multiple %266, 8 : i32
    %268 = arith.index_cast %267 : i32 to index
    %c0_80 = arith.constant 0 : index
    %269 = vector.load %arg8[%268, %c0_80] : memref<64x128xf32, #tpu.memory_space<vmem>>, vector<8x128xf32>
    %c0_81 = arith.constant 0 : index
    %c0_82 = arith.constant 0 : index
    %270 = vector.load %arg2[%c0_81, %c0_82] : memref<32x128xf32, #tpu.memory_space<vmem>>, vector<32x128xf32>
    %cst_83 = arith.constant dense<0.000000e+00> : vector<8x128xf32>
    %271 = tpu.matmul %244, %270, %cst_83 {dimension_numbers = #tpu.dot_dimension_numbers<[1], [0], [0], [1], [0, 0, 1, 1], [], []>} : vector<8x32xf32>, vector<32x128xf32>, vector<8x128xf32> -> vector<8x128xf32>
    %272 = arith.addf %269, %271 : vector<8x128xf32>
    %273 = arith.negf %272 : vector<8x128xf32>
    %274 = math.exp %273 : vector<8x128xf32>
    %cst_84 = arith.constant 1.000000e+00 : f32
    %275 = vector.broadcast %cst_84 : f32 to vector<8x128xf32>
    %276 = arith.addf %275, %274 : vector<8x128xf32>
    %277 = arith.divf %275, %276 : vector<8x128xf32>
    %278 = math.tanh %272 : vector<8x128xf32>
    %279 = vector.extract_strided_slice %277 {offsets = [0, 0], sizes = [8, 32], strides = [1, 1]} : vector<8x128xf32> to vector<8x32xf32>
    %280 = vector.extract_strided_slice %277 {offsets = [0, 32], sizes = [8, 32], strides = [1, 1]} : vector<8x128xf32> to vector<8x32xf32>
    %281 = vector.extract_strided_slice %278 {offsets = [0, 64], sizes = [8, 32], strides = [1, 1]} : vector<8x128xf32> to vector<8x32xf32>
    %282 = vector.extract_strided_slice %277 {offsets = [0, 96], sizes = [8, 32], strides = [1, 1]} : vector<8x128xf32> to vector<8x32xf32>
    %283 = arith.mulf %280, %242 : vector<8x32xf32>
    %284 = arith.mulf %279, %281 : vector<8x32xf32>
    %285 = arith.addf %283, %284 : vector<8x32xf32>
    %286 = math.tanh %285 : vector<8x32xf32>
    %287 = arith.mulf %282, %286 : vector<8x32xf32>
    %288 = tpu.concatenate %287, %265 in 1 : vector<8x32xf32>, vector<8x32xf32> -> vector<8x64xf32>
    %c0_85 = arith.constant 0 : index
    %c0_86 = arith.constant 0 : index
    %289 = vector.load %arg4[%c0_85, %c0_86] : memref<64x128xf32, #tpu.memory_space<vmem>>, vector<64x128xf32>
    %cst_87 = arith.constant dense<0.000000e+00> : vector<8x128xf32>
    %290 = tpu.matmul %288, %289, %cst_87 {dimension_numbers = #tpu.dot_dimension_numbers<[1], [0], [0], [1], [0, 0, 1, 1], [], []>} : vector<8x64xf32>, vector<64x128xf32>, vector<8x128xf32> -> vector<8x128xf32>
    %c0_88 = arith.constant 0 : index
    %c0_89 = arith.constant 0 : index
    %291 = vector.load %arg5[%c0_88, %c0_89] : memref<1x128xf32, #tpu.memory_space<vmem>>, vector<1x128xf32>
    %292 = vector.broadcast %291 : vector<1x128xf32> to vector<8x128xf32>
    %293 = arith.addf %290, %292 : vector<8x128xf32>
    %294 = arith.negf %293 : vector<8x128xf32>
    %295 = math.exp %294 : vector<8x128xf32>
    %cst_90 = arith.constant 1.000000e+00 : f32
    %296 = vector.broadcast %cst_90 : f32 to vector<8x128xf32>
    %297 = arith.addf %296, %295 : vector<8x128xf32>
    %298 = arith.divf %296, %297 : vector<8x128xf32>
    %299 = math.tanh %293 : vector<8x128xf32>
    %300 = vector.extract_strided_slice %298 {offsets = [0, 0], sizes = [8, 32], strides = [1, 1]} : vector<8x128xf32> to vector<8x32xf32>
    %301 = vector.extract_strided_slice %298 {offsets = [0, 32], sizes = [8, 32], strides = [1, 1]} : vector<8x128xf32> to vector<8x32xf32>
    %302 = vector.extract_strided_slice %299 {offsets = [0, 64], sizes = [8, 32], strides = [1, 1]} : vector<8x128xf32> to vector<8x32xf32>
    %303 = vector.extract_strided_slice %298 {offsets = [0, 96], sizes = [8, 32], strides = [1, 1]} : vector<8x128xf32> to vector<8x32xf32>
    %304 = arith.mulf %301, %263 : vector<8x32xf32>
    %305 = arith.mulf %300, %302 : vector<8x32xf32>
    %306 = arith.addf %304, %305 : vector<8x32xf32>
    %307 = math.tanh %306 : vector<8x32xf32>
    %308 = arith.mulf %303, %307 : vector<8x32xf32>
    %c7_i32 = arith.constant 7 : i32
    %c8_i32_91 = arith.constant 8 : i32
    %309 = arith.muli %c7_i32, %c8_i32_91 : i32
    %310 = tpu.assume_multiple %309, 8 : i32
    %311 = arith.index_cast %310 : i32 to index
    %c0_92 = arith.constant 0 : index
    %312 = vector.load %arg8[%311, %c0_92] : memref<64x128xf32, #tpu.memory_space<vmem>>, vector<8x128xf32>
    %c0_93 = arith.constant 0 : index
    %c0_94 = arith.constant 0 : index
    %313 = vector.load %arg2[%c0_93, %c0_94] : memref<32x128xf32, #tpu.memory_space<vmem>>, vector<32x128xf32>
    %cst_95 = arith.constant dense<0.000000e+00> : vector<8x128xf32>
    %314 = tpu.matmul %287, %313, %cst_95 {dimension_numbers = #tpu.dot_dimension_numbers<[1], [0], [0], [1], [0, 0, 1, 1], [], []>} : vector<8x32xf32>, vector<32x128xf32>, vector<8x128xf32> -> vector<8x128xf32>
    %315 = arith.addf %312, %314 : vector<8x128xf32>
    %316 = arith.negf %315 : vector<8x128xf32>
    %317 = math.exp %316 : vector<8x128xf32>
    %cst_96 = arith.constant 1.000000e+00 : f32
    %318 = vector.broadcast %cst_96 : f32 to vector<8x128xf32>
    %319 = arith.addf %318, %317 : vector<8x128xf32>
    %320 = arith.divf %318, %319 : vector<8x128xf32>
    %321 = math.tanh %315 : vector<8x128xf32>
    %322 = vector.extract_strided_slice %320 {offsets = [0, 0], sizes = [8, 32], strides = [1, 1]} : vector<8x128xf32> to vector<8x32xf32>
    %323 = vector.extract_strided_slice %320 {offsets = [0, 32], sizes = [8, 32], strides = [1, 1]} : vector<8x128xf32> to vector<8x32xf32>
    %324 = vector.extract_strided_slice %321 {offsets = [0, 64], sizes = [8, 32], strides = [1, 1]} : vector<8x128xf32> to vector<8x32xf32>
    %325 = vector.extract_strided_slice %320 {offsets = [0, 96], sizes = [8, 32], strides = [1, 1]} : vector<8x128xf32> to vector<8x32xf32>
    %326 = arith.mulf %323, %285 : vector<8x32xf32>
    %327 = arith.mulf %322, %324 : vector<8x32xf32>
    %328 = arith.addf %326, %327 : vector<8x32xf32>
    %329 = math.tanh %328 : vector<8x32xf32>
    %330 = arith.mulf %325, %329 : vector<8x32xf32>
    %331 = tpu.concatenate %330, %308 in 1 : vector<8x32xf32>, vector<8x32xf32> -> vector<8x64xf32>
    %c0_97 = arith.constant 0 : index
    %c0_98 = arith.constant 0 : index
    %332 = vector.load %arg4[%c0_97, %c0_98] : memref<64x128xf32, #tpu.memory_space<vmem>>, vector<64x128xf32>
    %cst_99 = arith.constant dense<0.000000e+00> : vector<8x128xf32>
    %333 = tpu.matmul %331, %332, %cst_99 {dimension_numbers = #tpu.dot_dimension_numbers<[1], [0], [0], [1], [0, 0, 1, 1], [], []>} : vector<8x64xf32>, vector<64x128xf32>, vector<8x128xf32> -> vector<8x128xf32>
    %c0_100 = arith.constant 0 : index
    %c0_101 = arith.constant 0 : index
    %334 = vector.load %arg5[%c0_100, %c0_101] : memref<1x128xf32, #tpu.memory_space<vmem>>, vector<1x128xf32>
    %335 = vector.broadcast %334 : vector<1x128xf32> to vector<8x128xf32>
    %336 = arith.addf %333, %335 : vector<8x128xf32>
    %337 = arith.negf %336 : vector<8x128xf32>
    %338 = math.exp %337 : vector<8x128xf32>
    %cst_102 = arith.constant 1.000000e+00 : f32
    %339 = vector.broadcast %cst_102 : f32 to vector<8x128xf32>
    %340 = arith.addf %339, %338 : vector<8x128xf32>
    %341 = arith.divf %339, %340 : vector<8x128xf32>
    %342 = math.tanh %336 : vector<8x128xf32>
    %343 = vector.extract_strided_slice %341 {offsets = [0, 0], sizes = [8, 32], strides = [1, 1]} : vector<8x128xf32> to vector<8x32xf32>
    %344 = vector.extract_strided_slice %341 {offsets = [0, 32], sizes = [8, 32], strides = [1, 1]} : vector<8x128xf32> to vector<8x32xf32>
    %345 = vector.extract_strided_slice %342 {offsets = [0, 64], sizes = [8, 32], strides = [1, 1]} : vector<8x128xf32> to vector<8x32xf32>
    %346 = vector.extract_strided_slice %341 {offsets = [0, 96], sizes = [8, 32], strides = [1, 1]} : vector<8x128xf32> to vector<8x32xf32>
    %347 = arith.mulf %344, %306 : vector<8x32xf32>
    %348 = arith.mulf %343, %345 : vector<8x32xf32>
    %349 = arith.addf %347, %348 : vector<8x32xf32>
    %350 = math.tanh %349 : vector<8x32xf32>
    %351 = arith.mulf %346, %350 : vector<8x32xf32>
    %c8_i32_103 = arith.constant 8 : i32
    %352 = vector.shape_cast %330 : vector<8x32xf32> to vector<1x8x32xf32>
    %353 = vector.shape_cast %351 : vector<8x32xf32> to vector<1x8x32xf32>
    %354 = tpu.concatenate %352, %353 in 0 : vector<1x8x32xf32>, vector<1x8x32xf32> -> vector<2x8x32xf32>
    %c0_104 = arith.constant 0 : index
    %c0_105 = arith.constant 0 : index
    %c0_106 = arith.constant 0 : index
    %355 = vector.load %arg6[%c0_104, %c0_105, %c0_106] : memref<2x8x32xf32, #tpu.memory_space<vmem>>, vector<2x8x32xf32>
    tpu.vector_store %arg6[%c0_104, %c0_105, %c0_106], %354 {strides = array<i32>} : memref<2x8x32xf32, #tpu.memory_space<vmem>>, vector<2x8x32xf32>,
    %356 = vector.shape_cast %328 : vector<8x32xf32> to vector<1x8x32xf32>
    %357 = vector.shape_cast %349 : vector<8x32xf32> to vector<1x8x32xf32>
    %358 = tpu.concatenate %356, %357 in 0 : vector<1x8x32xf32>, vector<1x8x32xf32> -> vector<2x8x32xf32>
    %c0_107 = arith.constant 0 : index
    %c0_108 = arith.constant 0 : index
    %c0_109 = arith.constant 0 : index
    %359 = vector.load %arg7[%c0_107, %c0_108, %c0_109] : memref<2x8x32xf32, #tpu.memory_space<vmem>>, vector<2x8x32xf32>
    tpu.vector_store %arg7[%c0_107, %c0_108, %c0_109], %358 {strides = array<i32>} : memref<2x8x32xf32, #tpu.memory_space<vmem>>, vector<2x8x32xf32>,
    return
  }
}

</mosaic_0001>

<llo_original>
// kernel: tpu_custom_call.1
$region0: #{tpu_custom_call.1}
  #allocation0 [shape = 'u32[]', space=smem, size = 0x4, offset = 0x4, fixed_abs, tag = 'smem constant byte address 0x4 - core index']
  #allocation1 [shape = 'u32[144,128]{1,0:T(1,128)}', space=vmem, size = 0x12000, scoped, tag = 'internal scratch']
  #allocation2 [shape = 'f32[64,128]{1,0:T(8,128)}', space=vmem, size = 0x8000, scoped, tag = 'scratch operand']
  %s0 = inlined_call_operand.vmem [shape: f32[64,16], index: 0, kind: input, shape index: {}]
  %s1 = inlined_call_operand.vmem [shape: f32[16,128], index: 1, kind: input, shape index: {}]
  %s2 = inlined_call_operand.hbm [shape: f32[32,128], index: 2, kind: input, shape index: {}]
  %s3 = inlined_call_operand.vmem [shape: f32[1,128], index: 3, kind: input, shape index: {}]
  %s4 = inlined_call_operand.vmem [shape: f32[64,128], index: 4, kind: input, shape index: {}]
  %s5 = inlined_call_operand.vmem [shape: f32[1,128], index: 5, kind: input, shape index: {}]
  %s6 = inlined_call_operand.hbm [shape: f32[2,8,32], index: 6, kind: output, shape index: {0}]
  %s7 = inlined_call_operand.hbm [shape: f32[2,8,32], index: 7, kind: output, shape index: {1}]
  %8 = xla_tuple %s6, %s7
  %s9 = sld [smem:[#allocation0]]
  $region46: #{tpu_custom_call.1} parent=0
    _
  %s11 = ssub.s32 1, %s9
  %s12 = scalar_select 0, %s11, %s9
  $region1: #{tpu_custom_call.1} parent=0
    #allocation3 [shape = 'u8[16384]{0}', space=vmem, size = 0x4000, scoped, tag = 'input window, operand 2, single buffered']
    #allocation4 [shape = 's32[1]{0}', space=sflag, size = 0x4, scoped, tag = 'scoped memory for tpu_custom_call.1']
    #allocation5 [shape = 's32[1]{0}', space=sflag, size = 0x4, scoped, tag = 'scoped memory for tpu_custom_call.1']
    #allocation6 [shape = 'u8[8192]{0}', space=vmem, size = 0x2000, scoped, tag = 'output window, operand 0, single buffered']
    #allocation7 [shape = 'u8[8192]{0}', space=vmem, size = 0x2000, scoped, tag = 'output window, operand 1, single buffered']
    #allocation8 [shape = 's32[1]{0}', space=sflag, size = 0x4, scoped, tag = 'scoped memory for tpu_custom_call.1']
    %13 = vsyncpa [#allocation4], 0
    %14 = vsyncpa [#allocation5], 0
    %15 = vsyncpa [#allocation8], 0
    // Predicated region
    $region2: #{tpu_custom_call.1} parent=1 // pred_check
      _
    $region3: #{tpu_custom_call.1} parent=1 // pred_check_branch
      %17 = sbr.rel (0) target = $region5
    $region4: #{tpu_custom_call.1} parent=1 // pred_region
      _
    $region5: #{tpu_custom_call.1} parent=1 // pred_fallthru
      _
    // Predicated region
    $region6: #{tpu_custom_call.1} parent=1 // pred_check
      _
    $region7: #{tpu_custom_call.1} parent=1 // pred_check_branch
      %19 = sbr.rel (0) target = $region9
    $region8: #{tpu_custom_call.1} parent=1 // pred_region
      _
    $region9: #{tpu_custom_call.1} parent=1 // pred_fallthru
      _
    // Predicated region
    $region10: #{tpu_custom_call.1} parent=1 // pred_check
      _
    $region11: #{tpu_custom_call.1} parent=1 // pred_check_branch
      %21 = sbr.rel (0) target = $region13
    $region12: #{tpu_custom_call.1} parent=1 // pred_region
      %s23 = ssub.s32 512, 512
      %24 = vsyncadd [#allocation4], %s23
      %s25 = sshll.u32 [#allocation3], 4
      %s26 = int_to_ptr.vmem [resolvable:$true] %s25
      %31 = dma.hbm_to_vmem [thread:$0]  %s2, 512, %s26, [#allocation4], 128, 128, 8
    $region13: #{tpu_custom_call.1} parent=1 // pred_fallthru
      _
    // Predicated region
    $region14: #{tpu_custom_call.1} parent=1 // pred_check
      _
    $region15: #{tpu_custom_call.1} parent=1 // pred_check_branch
      %33 = sbr.rel (0) target = $region17
    $region16: #{tpu_custom_call.1} parent=1 // pred_region
      _
    $region17: #{tpu_custom_call.1} parent=1 // pred_fallthru
      _
    // Predicated region
    $region18: #{tpu_custom_call.1} parent=1 // pred_check
      _
    $region19: #{tpu_custom_call.1} parent=1 // pred_check_branch
      %35 = sbr.rel (0) target = $region21
    $region20: #{tpu_custom_call.1} parent=1 // pred_region
      _
    $region21: #{tpu_custom_call.1} parent=1 // pred_fallthru
      _
    // Predicated region
    $region22: #{tpu_custom_call.1} parent=1 // pred_check
      _
    $region23: #{tpu_custom_call.1} parent=1 // pred_check_branch
      %37 = sbr.rel (0) target = $region25
    $region24: #{tpu_custom_call.1} parent=1 // pred_region
      _
    $region25: #{tpu_custom_call.1} parent=1 // pred_fallthru
      _
    // Predicated region
    $region26: #{tpu_custom_call.1} parent=1 // pred_check
      _
    $region27: #{tpu_custom_call.1} parent=1 // pred_check_branch
      %39 = sbr.rel (0) target = $region29
    $region28: #{tpu_custom_call.1} parent=1 // pred_region
      %40 = dma.done [#allocation4], 512
    $region29: #{tpu_custom_call.1} parent=1 // pred_fallthru
      _
    %v41 = vld [vmem:[%s0] sm:$0xff]
    %v42 = vld [vmem:[%s0 + $0x8] sm:$0xff]
    %v43 = vld [vmem:[%s0 + $0x10] sm:$0xff]
    %v44 = vld [vmem:[%s0 + $0x18] sm:$0xff]
    %v45 = vld [vmem:[%s0 + $0x20] sm:$0xff]
    %v46 = vld [vmem:[%s0 + $0x28] sm:$0xff]
    %v47 = vld [vmem:[%s0 + $0x30] sm:$0xff]
    %v48 = vld [vmem:[%s0 + $0x38] sm:$0xff]
    %v49 = vld [vmem:[%s1] sm:$0xff]
    %v50 = vld [vmem:[%s1 + $0x8] sm:$0xff]
    %v51 = vld [vmem:[%s3] sm:$0x1]
    %v53 = vlaneseq
    %v54 = vshrl.u32 %v53, 7
    %v55 = vsub.s32 0, %v54
    %v56 = vrot.slane %v51, %v55
    %vm58 = vcmask 130048
    %v60 = vsel %vm58, %v41, 0
    %v63 = vsel %vm58, %v42, 0
    %v66 = vsel %vm58, %v43, 0
    %v69 = vsel %vm58, %v44, 0
    %v72 = vsel %vm58, %v45, 0
    %v75 = vsel %vm58, %v46, 0
    %v78 = vsel %vm58, %v47, 0
    %v81 = vsel %vm58, %v48, 0
    %83 = vmatprep.subr.mxu0 0.0
    %84 = vmatpush1.msra.mxu0 0.0
    %85 = vmatprep.subr.mxu0 0.0
    %86 = vmatpush1.msra.mxu0 0.0
    %87 = vmatprep.subr.mxu0 0.0
    %88 = vmatpush1.msra.mxu0 0.0
    %89 = vmatprep.subr.mxu0 0.0
    %90 = vmatpush1.msra.mxu0 0.0
    %91 = vmatprep.subr.mxu0 0.0
    %92 = vmatpush1.msra.mxu0 0.0
    %93 = vmatprep.subr.mxu0 0.0
    %94 = vmatpush1.msra.mxu0 0.0
    %95 = vmatprep.subr.mxu0 0.0
    %96 = vmatpush1.msra.mxu0 0.0
    %97 = vmatprep.subr.mxu0 0.0
    %98 = vmatpush1.msra.mxu0 0.0
    %99 = vmatprep.subr.mxu0 0.0
    %100 = vmatpush1.msra.mxu0 0.0
    %101 = vmatprep.subr.mxu0 0.0
    %102 = vmatpush1.msra.mxu0 0.0
    %103 = vmatprep.subr.mxu0 0.0
    %104 = vmatpush1.msra.mxu0 0.0
    %105 = vmatprep.subr.mxu0 0.0
    %106 = vmatpush1.msra.mxu0 0.0
    %107 = vmatprep.subr.mxu0 0.0
    %108 = vmatpush1.msra.mxu0 0.0
    %109 = vmatprep.subr.mxu0 0.0
    %110 = vmatpush1.msra.mxu0 0.0
    %111 = vmatprep.subr.mxu0 0.0
    %112 = vmatpush1.msra.mxu0 %v50
    %113 = vmatprep.subr.mxu0 0.0
    %114 = vmatpush1.msra.mxu0 %v49
    %115 = vmatprep.subr.mxu0 0.0
    %116 = vmatpush2.msra.mxu0 0.0
    %117 = vmatprep.subr.mxu0 0.0
    %118 = vmatpush2.msra.mxu0 0.0
    %119 = vmatprep.subr.mxu0 0.0
    %120 = vmatpush2.msra.mxu0 0.0
    %121 = vmatprep.subr.mxu0 0.0
    %122 = vmatpush2.msra.mxu0 0.0
    %123 = vmatprep.subr.mxu0 0.0
    %124 = vmatpush2.msra.mxu0 0.0
    %125 = vmatprep.subr.mxu0 0.0
    %126 = vmatpush2.msra.mxu0 0.0
    %127 = vmatprep.subr.mxu0 0.0
    %128 = vmatpush2.msra.mxu0 0.0
    %129 = vmatprep.subr.mxu0 0.0
    %130 = vmatpush2.msra.mxu0 0.0
    %131 = vmatprep.subr.mxu0 0.0
    %132 = vmatpush2.msra.mxu0 0.0
    %133 = vmatprep.subr.mxu0 0.0
    %134 = vmatpush2.msra.mxu0 0.0
    %135 = vmatprep.subr.mxu0 0.0
    %136 = vmatpush2.msra.mxu0 0.0
    %137 = vmatprep.subr.mxu0 0.0
    %138 = vmatpush2.msra.mxu0 0.0
    %139 = vmatprep.subr.mxu0 0.0
    %140 = vmatpush2.msra.mxu0 0.0
    %141 = vmatprep.subr.mxu0 0.0
    %142 = vmatpush2.msra.mxu0 0.0
    %143 = vmatprep.subr.mxu0 0.0
    %144 = vmatpush2.msra.mxu0 0.0
    %145 = vmatprep.subr.mxu0 0.0
    %146 = vmatpush2.msra.mxu0 0.0
    %147 = vmatprep.mubr.f32.mxu0 0.0
    %148 = vmatmul.mubr.f32.gmra.mxu0 %v60
    %v149 = vpop.f32.mrf.mxu0
    %v150 = vadd.f32 %v56, %v149
    %v151 = vpop.f32.mrf.mxu0
    %152 = vmatprep.mubr.f32.mxu0 0.0
    %153 = vmatmul.mubr.f32.gmra.mxu0 %v63
    %v154 = vpop.f32.mrf.mxu0
    %v155 = vadd.f32 %v56, %v154
    %v156 = vpop.f32.mrf.mxu0
    %157 = vmatprep.mubr.f32.mxu0 0.0
    %158 = vmatmul.mubr.f32.gmra.mxu0 %v66
    %v159 = vpop.f32.mrf.mxu0
    %v160 = vadd.f32 %v56, %v159
    %v161 = vpop.f32.mrf.mxu0
    %162 = vmatprep.mubr.f32.mxu0 0.0
    %163 = vmatmul.mubr.f32.gmra.mxu0 %v69
    %v164 = vpop.f32.mrf.mxu0
    %v165 = vadd.f32 %v56, %v164
    %v166 = vpop.f32.mrf.mxu0
    %167 = vmatprep.mubr.f32.mxu0 0.0
    %168 = vmatmul.mubr.f32.gmra.mxu0 %v72
    %v169 = vpop.f32.mrf.mxu0
    %v170 = vadd.f32 %v56, %v169
    %v171 = vpop.f32.mrf.mxu0
    %172 = vmatprep.mubr.f32.mxu0 0.0
    %173 = vmatmul.mubr.f32.gmra.mxu0 %v75
    %v174 = vpop.f32.mrf.mxu0
    %v175 = vadd.f32 %v56, %v174
    %v176 = vpop.f32.mrf.mxu0
    %177 = vmatprep.mubr.f32.mxu0 0.0
    %178 = vmatmul.mubr.f32.gmra.mxu0 %v78
    %v179 = vpop.f32.mrf.mxu0
    %v180 = vadd.f32 %v56, %v179
    %v181 = vpop.f32.mrf.mxu0
    %182 = vmatprep.mubr.f32.mxu0 0.0
    %183 = vmatmul.mubr.f32.gmra.mxu0 %v81
    %v184 = vpop.f32.mrf.mxu0
    %v185 = vadd.f32 %v56, %v184
    %v186 = vpop.f32.mrf.mxu0
    %187 = vdwg.mxu0
    %188 = vst [vmem:[#allocation2] sm:$0xff] %v150
    %189 = vst [vmem:[#allocation2 + $0x8] sm:$0xff] %v155
    %190 = vst [vmem:[#allocation2 + $0x10] sm:$0xff] %v160
    %191 = vst [vmem:[#allocation2 + $0x18] sm:$0xff] %v165
    %192 = vst [vmem:[#allocation2 + $0x20] sm:$0xff] %v170
    %193 = vst [vmem:[#allocation2 + $0x28] sm:$0xff] %v175
    %194 = vst [vmem:[#allocation2 + $0x30] sm:$0xff] %v180
    %195 = vst [vmem:[#allocation2 + $0x38] sm:$0xff] %v185
    %v196 = vld [vmem:[#allocation2] sm:$0xff]
    %v197 = vld [vmem:[#allocation3] sm:$0xff]
    %v198 = vld [vmem:[#allocation3 + $0x8] sm:$0xff]
    %v199 = vld [vmem:[#allocation3 + $0x10] sm:$0xff]
    %v200 = vld [vmem:[#allocation3 + $0x18] sm:$0xff]
    %vm201 = vcmask 261120
    %v203 = vsel %vm201, 0.0, 0
    %205 = vmatprep.subr.mxu0 0.0
    %206 = vmatpush1.msra.mxu0 0.0
    %207 = vmatprep.subr.mxu0 0.0
    %208 = vmatpush1.msra.mxu0 0.0
    %209 = vmatprep.subr.mxu0 0.0
    %210 = vmatpush1.msra.mxu0 0.0
    %211 = vmatprep.subr.mxu0 0.0
    %212 = vmatpush1.msra.mxu0 0.0
    %213 = vmatprep.subr.mxu0 0.0
    %214 = vmatpush1.msra.mxu0 0.0
    %215 = vmatprep.subr.mxu0 0.0
    %216 = vmatpush1.msra.mxu0 0.0
    %217 = vmatprep.subr.mxu0 0.0
    %218 = vmatpush1.msra.mxu0 0.0
    %219 = vmatprep.subr.mxu0 0.0
    %220 = vmatpush1.msra.mxu0 0.0
    %221 = vmatprep.subr.mxu0 0.0
    %222 = vmatpush1.msra.mxu0 0.0
    %223 = vmatprep.subr.mxu0 0.0
    %224 = vmatpush1.msra.mxu0 0.0
    %225 = vmatprep.subr.mxu0 0.0
    %226 = vmatpush1.msra.mxu0 0.0
    %227 = vmatprep.subr.mxu0 0.0
    %228 = vmatpush1.msra.mxu0 0.0
    %229 = vmatprep.subr.mxu0 0.0
    %230 = vmatpush1.msra.mxu0 %v200
    %231 = vmatprep.subr.mxu0 0.0
    %232 = vmatpush1.msra.mxu0 %v199
    %233 = vmatprep.subr.mxu0 0.0
    %234 = vmatpush1.msra.mxu0 %v198
    %235 = vmatprep.subr.mxu0 0.0
    %236 = vmatpush1.msra.mxu0 %v197
    %237 = vmatprep.subr.mxu0 0.0
    %238 = vmatpush2.msra.mxu0 0.0
    %239 = vmatprep.subr.mxu0 0.0
    %240 = vmatpush2.msra.mxu0 0.0
    %241 = vmatprep.subr.mxu0 0.0
    %242 = vmatpush2.msra.mxu0 0.0
    %243 = vmatprep.subr.mxu0 0.0
    %244 = vmatpush2.msra.mxu0 0.0
    %245 = vmatprep.subr.mxu0 0.0
    %246 = vmatpush2.msra.mxu0 0.0
    %247 = vmatprep.subr.mxu0 0.0
    %248 = vmatpush2.msra.mxu0 0.0
    %249 = vmatprep.subr.mxu0 0.0
    %250 = vmatpush2.msra.mxu0 0.0
    %251 = vmatprep.subr.mxu0 0.0
    %252 = vmatpush2.msra.mxu0 0.0
    %253 = vmatprep.subr.mxu0 0.0
    %254 = vmatpush2.msra.mxu0 0.0
    %255 = vmatprep.subr.mxu0 0.0
    %256 = vmatpush2.msra.mxu0 0.0
    %257 = vmatprep.subr.mxu0 0.0
    %258 = vmatpush2.msra.mxu0 0.0
    %259 = vmatprep.subr.mxu0 0.0
    %260 = vmatpush2.msra.mxu0 0.0
    %261 = vmatprep.subr.mxu0 0.0
    %262 = vmatpush2.msra.mxu0 0.0
    %263 = vmatprep.subr.mxu0 0.0
    %264 = vmatpush2.msra.mxu0 0.0
    %265 = vmatprep.subr.mxu0 0.0
    %266 = vmatpush2.msra.mxu0 0.0
    %267 = vmatprep.subr.mxu0 0.0
    %268 = vmatpush2.msra.mxu0 0.0
    %269 = vmatprep.mubr.f32.mxu0 0.0
    %270 = vmatmul.mubr.f32.gmra.mxu0 %v203
    %v271 = vpop.f32.mrf.mxu0
    %v272 = vadd.f32 0.0, %v271
    %v273 = vpop.f32.mrf.mxu0
    %274 = vdwg.mxu0
    %v275 = vadd.f32 %v196, %v272
    %v276 = vxor.u32 %v275, 2147483648
    %v277 = vmul.f32 %v276, 1.442695
    %v278 = vpow.pop %v277
    %v279 = vadd.f32 %v278, 1.0
    %v280 = vrcp.pop %v279
    %v281 = vmul.f32 1.0, %v280
    %v282 = vtanh.pop %v275
    %v283 = vmul.f32 %v281, 0.0
    %285 = vrot.lane.b32.xlu0 %v282, 64
    %v286 = vpop.permute.xlu0 %285
    %v288 = vmul.f32 %v281, %v286
    %290 = vrot.lane.b32.xlu0 %v288, 32
    %v291 = vpop.permute.xlu0 %290
    %v293 = vadd.f32 %v283, %v291
    %v294 = vtanh.pop %v293
    %296 = vrot.lane.b32.xlu0 %v294, 64
    %v297 = vpop.permute.xlu0 %296
    %v299 = vmul.f32 %v281, %v297
    %301 = vrot.lane.b32.xlu0 %v299, 32
    %v302 = vpop.permute.xlu0 %301
    %v304 = vsel %vm201, %v302, 0.0
    %v305 = vld [vmem:[%s4] sm:$0xff]
    %v306 = vld [vmem:[%s4 + $0x8] sm:$0xff]
    %v307 = vld [vmem:[%s4 + $0x10] sm:$0xff]
    %v308 = vld [vmem:[%s4 + $0x18] sm:$0xff]
    %v309 = vld [vmem:[%s4 + $0x20] sm:$0xff]
    %v310 = vld [vmem:[%s4 + $0x28] sm:$0xff]
    %v311 = vld [vmem:[%s4 + $0x30] sm:$0xff]
    %v312 = vld [vmem:[%s4 + $0x38] sm:$0xff]
    %v313 = vld [vmem:[%s5] sm:$0x1]
    %v315 = vlaneseq
    %v316 = vshrl.u32 %v315, 7
    %v317 = vsub.s32 0, %v316
    %v318 = vrot.slane %v313, %v317
    %vm320 = vcmask 523264
    %v322 = vsel %vm320, %v304, 0
    %324 = vmatprep.subr.mxu0 0.0
    %325 = vmatpush1.msra.mxu0 0.0
    %326 = vmatprep.subr.mxu0 0.0
    %327 = vmatpush1.msra.mxu0 0.0
    %328 = vmatprep.subr.mxu0 0.0
    %329 = vmatpush1.msra.mxu0 0.0
    %330 = vmatprep.subr.mxu0 0.0
    %331 = vmatpush1.msra.mxu0 0.0
    %332 = vmatprep.subr.mxu0 0.0
    %333 = vmatpush1.msra.mxu0 0.0
    %334 = vmatprep.subr.mxu0 0.0
    %335 = vmatpush1.msra.mxu0 0.0
    %336 = vmatprep.subr.mxu0 0.0
    %337 = vmatpush1.msra.mxu0 0.0
    %338 = vmatprep.subr.mxu0 0.0
    %339 = vmatpush1.msra.mxu0 0.0
    %340 = vmatprep.subr.mxu0 0.0
    %341 = vmatpush1.msra.mxu0 %v312
    %342 = vmatprep.subr.mxu0 0.0
    %343 = vmatpush1.msra.mxu0 %v311
    %344 = vmatprep.subr.mxu0 0.0
    %345 = vmatpush1.msra.mxu0 %v310
    %346 = vmatprep.subr.mxu0 0.0
    %347 = vmatpush1.msra.mxu0 %v309
    %348 = vmatprep.subr.mxu0 0.0
    %349 = vmatpush1.msra.mxu0 %v308
    %350 = vmatprep.subr.mxu0 0.0
    %351 = vmatpush1.msra.mxu0 %v307
    %352 = vmatprep.subr.mxu0 0.0
    %353 = vmatpush1.msra.mxu0 %v306
    %354 = vmatprep.subr.mxu0 0.0
    %355 = vmatpush1.msra.mxu0 %v305
    %356 = vmatprep.subr.mxu0 0.0
    %357 = vmatpush2.msra.mxu0 0.0
    %358 = vmatprep.subr.mxu0 0.0
    %359 = vmatpush2.msra.mxu0 0.0
    %360 = vmatprep.subr.mxu0 0.0
    %361 = vmatpush2.msra.mxu0 0.0
    %362 = vmatprep.subr.mxu0 0.0
    %363 = vmatpush2.msra.mxu0 0.0
    %364 = vmatprep.subr.mxu0 0.0
    %365 = vmatpush2.msra.mxu0 0.0
    %366 = vmatprep.subr.mxu0 0.0
    %367 = vmatpush2.msra.mxu0 0.0
    %368 = vmatprep.subr.mxu0 0.0
    %369 = vmatpush2.msra.mxu0 0.0
    %370 = vmatprep.subr.mxu0 0.0
    %371 = vmatpush2.msra.mxu0 0.0
    %372 = vmatprep.subr.mxu0 0.0
    %373 = vmatpush2.msra.mxu0 0.0
    %374 = vmatprep.subr.mxu0 0.0
    %375 = vmatpush2.msra.mxu0 0.0
    %376 = vmatprep.subr.mxu0 0.0
    %377 = vmatpush2.msra.mxu0 0.0
    %378 = vmatprep.subr.mxu0 0.0
    %379 = vmatpush2.msra.mxu0 0.0
    %380 = vmatprep.subr.mxu0 0.0
    %381 = vmatpush2.msra.mxu0 0.0
    %382 = vmatprep.subr.mxu0 0.0
    %383 = vmatpush2.msra.mxu0 0.0
    %384 = vmatprep.subr.mxu0 0.0
    %385 = vmatpush2.msra.mxu0 0.0
    %386 = vmatprep.subr.mxu0 0.0
    %387 = vmatpush2.msra.mxu0 0.0
    %388 = vmatprep.mubr.f32.mxu0 0.0
    %389 = vmatmul.mubr.f32.gmra.mxu0 %v322
    %v390 = vpop.f32.mrf.mxu0
    %v391 = vadd.f32 %v318, %v390
    %v392 = vpop.f32.mrf.mxu0
    %393 = vdwg.mxu0
    %v394 = vxor.u32 %v391, 2147483648
    %v395 = vmul.f32 %v394, 1.442695
    %v396 = vpow.pop %v395
    %v397 = vadd.f32 %v396, 1.0
    %v398 = vrcp.pop %v397
    %v399 = vmul.f32 1.0, %v398
    %v400 = vtanh.pop %v391
    %v401 = vmul.f32 %v399, 0.0
    %403 = vrot.lane.b32.xlu0 %v400, 64
    %v404 = vpop.permute.xlu0 %403
    %v406 = vmul.f32 %v399, %v404
    %408 = vrot.lane.b32.xlu0 %v406, 32
    %v409 = vpop.permute.xlu0 %408
    %v411 = vadd.f32 %v401, %v409
    %v412 = vtanh.pop %v411
    %414 = vrot.lane.b32.xlu0 %v412, 64
    %v415 = vpop.permute.xlu0 %414
    %v417 = vmul.f32 %v399, %v415
    %s418 = scalar_lea.vmem [#allocation2], 8
    %v419 = vld [vmem:[%s418] sm:$0xff]
    %v420 = vsel %vm201, %v302, 0
    %422 = vmatprep.subr.mxu0 0.0
    %423 = vmatpush1.msra.mxu0 0.0
    %424 = vmatprep.subr.mxu0 0.0
    %425 = vmatpush1.msra.mxu0 0.0
    %426 = vmatprep.subr.mxu0 0.0
    %427 = vmatpush1.msra.mxu0 0.0
    %428 = vmatprep.subr.mxu0 0.0
    %429 = vmatpush1.msra.mxu0 0.0
    %430 = vmatprep.subr.mxu0 0.0
    %431 = vmatpush1.msra.mxu0 0.0
    %432 = vmatprep.subr.mxu0 0.0
    %433 = vmatpush1.msra.mxu0 0.0
    %434 = vmatprep.subr.mxu0 0.0
    %435 = vmatpush1.msra.mxu0 0.0
    %436 = vmatprep.subr.mxu0 0.0
    %437 = vmatpush1.msra.mxu0 0.0
    %438 = vmatprep.subr.mxu0 0.0
    %439 = vmatpush1.msra.mxu0 0.0
    %440 = vmatprep.subr.mxu0 0.0
    %441 = vmatpush1.msra.mxu0 0.0
    %442 = vmatprep.subr.mxu0 0.0
    %443 = vmatpush1.msra.mxu0 0.0
    %444 = vmatprep.subr.mxu0 0.0
    %445 = vmatpush1.msra.mxu0 0.0
    %446 = vmatprep.subr.mxu0 0.0
    %447 = vmatpush1.msra.mxu0 %v200
    %448 = vmatprep.subr.mxu0 0.0
    %449 = vmatpush1.msra.mxu0 %v199
    %450 = vmatprep.subr.mxu0 0.0
    %451 = vmatpush1.msra.mxu0 %v198
    %452 = vmatprep.subr.mxu0 0.0
    %453 = vmatpush1.msra.mxu0 %v197
    %454 = vmatprep.subr.mxu0 0.0
    %455 = vmatpush2.msra.mxu0 0.0
    %456 = vmatprep.subr.mxu0 0.0
    %457 = vmatpush2.msra.mxu0 0.0
    %458 = vmatprep.subr.mxu0 0.0
    %459 = vmatpush2.msra.mxu0 0.0
    %460 = vmatprep.subr.mxu0 0.0
    %461 = vmatpush2.msra.mxu0 0.0
    %462 = vmatprep.subr.mxu0 0.0
    %463 = vmatpush2.msra.mxu0 0.0
    %464 = vmatprep.subr.mxu0 0.0
    %465 = vmatpush2.msra.mxu0 0.0
    %466 = vmatprep.subr.mxu0 0.0
    %467 = vmatpush2.msra.mxu0 0.0
    %468 = vmatprep.subr.mxu0 0.0
    %469 = vmatpush2.msra.mxu0 0.0
    %470 = vmatprep.subr.mxu0 0.0
    %471 = vmatpush2.msra.mxu0 0.0
    %472 = vmatprep.subr.mxu0 0.0
    %473 = vmatpush2.msra.mxu0 0.0
    %474 = vmatprep.subr.mxu0 0.0
    %475 = vmatpush2.msra.mxu0 0.0
    %476 = vmatprep.subr.mxu0 0.0
    %477 = vmatpush2.msra.mxu0 0.0
    %478 = vmatprep.subr.mxu0 0.0
    %479 = vmatpush2.msra.mxu0 0.0
    %480 = vmatprep.subr.mxu0 0.0
    %481 = vmatpush2.msra.mxu0 0.0
    %482 = vmatprep.subr.mxu0 0.0
    %483 = vmatpush2.msra.mxu0 0.0
    %484 = vmatprep.subr.mxu0 0.0
    %485 = vmatpush2.msra.mxu0 0.0
    %486 = vmatprep.mubr.f32.mxu0 0.0
    %487 = vmatmul.mubr.f32.gmra.mxu0 %v420
    %v488 = vpop.f32.mrf.mxu0
    %v489 = vadd.f32 0.0, %v488
    %v490 = vpop.f32.mrf.mxu0
    %491 = vdwg.mxu0
    %v492 = vadd.f32 %v419, %v489
    %v493 = vxor.u32 %v492, 2147483648
    %v494 = vmul.f32 %v493, 1.442695
    %v495 = vpow.pop %v494
    %v496 = vadd.f32 %v495, 1.0
    %v497 = vrcp.pop %v496
    %v498 = vmul.f32 1.0, %v497
    %v499 = vtanh.pop %v492
    %v500 = vmul.f32 %v498, %v293
    %502 = vrot.lane.b32.xlu0 %v499, 64
    %v503 = vpop.permute.xlu0 %502
    %v505 = vmul.f32 %v498, %v503
    %507 = vrot.lane.b32.xlu0 %v505, 32
    %v508 = vpop.permute.xlu0 %507
    %v510 = vadd.f32 %v500, %v508
    %v511 = vtanh.pop %v510
    %513 = vrot.lane.b32.xlu0 %v511, 64
    %v514 = vpop.permute.xlu0 %513
    %v516 = vmul.f32 %v498, %v514
    %518 = vrot.lane.b32.xlu0 %v516, 32
    %v519 = vpop.permute.xlu0 %518
    %522 = vrot.lane.b32.xlu0 %v417, 64
    %v523 = vpop.permute.xlu0 %522
    %v525 = vsel %vm201, %v519, %v523
    %v527 = vsel %vm320, %v525, 0
    %529 = vmatprep.subr.mxu0 0.0
    %530 = vmatpush1.msra.mxu0 0.0
    %531 = vmatprep.subr.mxu0 0.0
    %532 = vmatpush1.msra.mxu0 0.0
    %533 = vmatprep.subr.mxu0 0.0
    %534 = vmatpush1.msra.mxu0 0.0
    %535 = vmatprep.subr.mxu0 0.0
    %536 = vmatpush1.msra.mxu0 0.0
    %537 = vmatprep.subr.mxu0 0.0
    %538 = vmatpush1.msra.mxu0 0.0
    %539 = vmatprep.subr.mxu0 0.0
    %540 = vmatpush1.msra.mxu0 0.0
    %541 = vmatprep.subr.mxu0 0.0
    %542 = vmatpush1.msra.mxu0 0.0
    %543 = vmatprep.subr.mxu0 0.0
    %544 = vmatpush1.msra.mxu0 0.0
    %545 = vmatprep.subr.mxu0 0.0
    %546 = vmatpush1.msra.mxu0 %v312
    %547 = vmatprep.subr.mxu0 0.0
    %548 = vmatpush1.msra.mxu0 %v311
    %549 = vmatprep.subr.mxu0 0.0
    %550 = vmatpush1.msra.mxu0 %v310
    %551 = vmatprep.subr.mxu0 0.0
    %552 = vmatpush1.msra.mxu0 %v309
    %553 = vmatprep.subr.mxu0 0.0
    %554 = vmatpush1.msra.mxu0 %v308
    %555 = vmatprep.subr.mxu0 0.0
    %556 = vmatpush1.msra.mxu0 %v307
    %557 = vmatprep.subr.mxu0 0.0
    %558 = vmatpush1.msra.mxu0 %v306
    %559 = vmatprep.subr.mxu0 0.0
    %560 = vmatpush1.msra.mxu0 %v305
    %561 = vmatprep.subr.mxu0 0.0
    %562 = vmatpush2.msra.mxu0 0.0
    %563 = vmatprep.subr.mxu0 0.0
    %564 = vmatpush2.msra.mxu0 0.0
    %565 = vmatprep.subr.mxu0 0.0
    %566 = vmatpush2.msra.mxu0 0.0
    %567 = vmatprep.subr.mxu0 0.0
    %568 = vmatpush2.msra.mxu0 0.0
    %569 = vmatprep.subr.mxu0 0.0
    %570 = vmatpush2.msra.mxu0 0.0
    %571 = vmatprep.subr.mxu0 0.0
    %572 = vmatpush2.msra.mxu0 0.0
    %573 = vmatprep.subr.mxu0 0.0
    %574 = vmatpush2.msra.mxu0 0.0
    %575 = vmatprep.subr.mxu0 0.0
    %576 = vmatpush2.msra.mxu0 0.0
    %577 = vmatprep.subr.mxu0 0.0
    %578 = vmatpush2.msra.mxu0 0.0
    %579 = vmatprep.subr.mxu0 0.0
    %580 = vmatpush2.msra.mxu0 0.0
    %581 = vmatprep.subr.mxu0 0.0
    %582 = vmatpush2.msra.mxu0 0.0
    %583 = vmatprep.subr.mxu0 0.0
    %584 = vmatpush2.msra.mxu0 0.0
    %585 = vmatprep.subr.mxu0 0.0
    %586 = vmatpush2.msra.mxu0 0.0
    %587 = vmatprep.subr.mxu0 0.0
    %588 = vmatpush2.msra.mxu0 0.0
    %589 = vmatprep.subr.mxu0 0.0
    %590 = vmatpush2.msra.mxu0 0.0
    %591 = vmatprep.subr.mxu0 0.0
    %592 = vmatpush2.msra.mxu0 0.0
    %593 = vmatprep.mubr.f32.mxu0 0.0
    %594 = vmatmul.mubr.f32.gmra.mxu0 %v527
    %v595 = vpop.f32.mrf.mxu0
    %v596 = vadd.f32 %v318, %v595
    %v597 = vpop.f32.mrf.mxu0
    %598 = vdwg.mxu0
    %v599 = vxor.u32 %v596, 2147483648
    %v600 = vmul.f32 %v599, 1.442695
    %v601 = vpow.pop %v600
    %v602 = vadd.f32 %v601, 1.0
    %v603 = vrcp.pop %v602
    %v604 = vmul.f32 1.0, %v603
    %v605 = vtanh.pop %v596
    %v606 = vmul.f32 %v604, %v411
    %608 = vrot.lane.b32.xlu0 %v605, 64
    %v609 = vpop.permute.xlu0 %608
    %v611 = vmul.f32 %v604, %v609
    %613 = vrot.lane.b32.xlu0 %v611, 32
    %v614 = vpop.permute.xlu0 %613
    %v616 = vadd.f32 %v606, %v614
    %v617 = vtanh.pop %v616
    %619 = vrot.lane.b32.xlu0 %v617, 64
    %v620 = vpop.permute.xlu0 %619
    %v622 = vmul.f32 %v604, %v620
    %s623 = scalar_lea.vmem [#allocation2], 16
    %v624 = vld [vmem:[%s623] sm:$0xff]
    %v625 = vsel %vm201, %v519, 0
    %627 = vmatprep.subr.mxu0 0.0
    %628 = vmatpush1.msra.mxu0 0.0
    %629 = vmatprep.subr.mxu0 0.0
    %630 = vmatpush1.msra.mxu0 0.0
    %631 = vmatprep.subr.mxu0 0.0
    %632 = vmatpush1.msra.mxu0 0.0
    %633 = vmatprep.subr.mxu0 0.0
    %634 = vmatpush1.msra.mxu0 0.0
    %635 = vmatprep.subr.mxu0 0.0
    %636 = vmatpush1.msra.mxu0 0.0
    %637 = vmatprep.subr.mxu0 0.0
    %638 = vmatpush1.msra.mxu0 0.0
    %639 = vmatprep.subr.mxu0 0.0
    %640 = vmatpush1.msra.mxu0 0.0
    %641 = vmatprep.subr.mxu0 0.0
    %642 = vmatpush1.msra.mxu0 0.0
    %643 = vmatprep.subr.mxu0 0.0
    %644 = vmatpush1.msra.mxu0 0.0
    %645 = vmatprep.subr.mxu0 0.0
    %646 = vmatpush1.msra.mxu0 0.0
    %647 = vmatprep.subr.mxu0 0.0
    %648 = vmatpush1.msra.mxu0 0.0
    %649 = vmatprep.subr.mxu0 0.0
    %650 = vmatpush1.msra.mxu0 0.0
    %651 = vmatprep.subr.mxu0 0.0
    %652 = vmatpush1.msra.mxu0 %v200
    %653 = vmatprep.subr.mxu0 0.0
    %654 = vmatpush1.msra.mxu0 %v199
    %655 = vmatprep.subr.mxu0 0.0
    %656 = vmatpush1.msra.mxu0 %v198
    %657 = vmatprep.subr.mxu0 0.0
    %658 = vmatpush1.msra.mxu0 %v197
    %659 = vmatprep.subr.mxu0 0.0
    %660 = vmatpush2.msra.mxu0 0.0
    %661 = vmatprep.subr.mxu0 0.0
    %662 = vmatpush2.msra.mxu0 0.0
    %663 = vmatprep.subr.mxu0 0.0
    %664 = vmatpush2.msra.mxu0 0.0
    %665 = vmatprep.subr.mxu0 0.0
    %666 = vmatpush2.msra.mxu0 0.0
    %667 = vmatprep.subr.mxu0 0.0
    %668 = vmatpush2.msra.mxu0 0.0
    %669 = vmatprep.subr.mxu0 0.0
    %670 = vmatpush2.msra.mxu0 0.0
    %671 = vmatprep.subr.mxu0 0.0
    %672 = vmatpush2.msra.mxu0 0.0
    %673 = vmatprep.subr.mxu0 0.0
    %674 = vmatpush2.msra.mxu0 0.0
    %675 = vmatprep.subr.mxu0 0.0
    %676 = vmatpush2.msra.mxu0 0.0
    %677 = vmatprep.subr.mxu0 0.0
    %678 = vmatpush2.msra.mxu0 0.0
    %679 = vmatprep.subr.mxu0 0.0
    %680 = vmatpush2.msra.mxu0 0.0
    %681 = vmatprep.subr.mxu0 0.0
    %682 = vmatpush2.msra.mxu0 0.0
    %683 = vmatprep.subr.mxu0 0.0
    %684 = vmatpush2.msra.mxu0 0.0
    %685 = vmatprep.subr.mxu0 0.0
    %686 = vmatpush2.msra.mxu0 0.0
    %687 = vmatprep.subr.mxu0 0.0
    %688 = vmatpush2.msra.mxu0 0.0
    %689 = vmatprep.subr.mxu0 0.0
    %690 = vmatpush2.msra.mxu0 0.0
    %691 = vmatprep.mubr.f32.mxu0 0.0
    %692 = vmatmul.mubr.f32.gmra.mxu0 %v625
    %v693 = vpop.f32.mrf.mxu0
    %v694 = vadd.f32 0.0, %v693
    %v695 = vpop.f32.mrf.mxu0
    %696 = vdwg.mxu0
    %v697 = vadd.f32 %v624, %v694
    %v698 = vxor.u32 %v697, 2147483648
    %v699 = vmul.f32 %v698, 1.442695
    %v700 = vpow.pop %v699
    %v701 = vadd.f32 %v700, 1.0
    %v702 = vrcp.pop %v701
    %v703 = vmul.f32 1.0, %v702
    %v704 = vtanh.pop %v697
    %v705 = vmul.f32 %v703, %v510
    %707 = vrot.lane.b32.xlu0 %v704, 64
    %v708 = vpop.permute.xlu0 %707
    %v710 = vmul.f32 %v703, %v708
    %712 = vrot.lane.b32.xlu0 %v710, 32
    %v713 = vpop.permute.xlu0 %712
    %v715 = vadd.f32 %v705, %v713
    %v716 = vtanh.pop %v715
    %718 = vrot.lane.b32.xlu0 %v716, 64
    %v719 = vpop.permute.xlu0 %718
    %v721 = vmul.f32 %v703, %v719
    %723 = vrot.lane.b32.xlu0 %v721, 32
    %v724 = vpop.permute.xlu0 %723
    %727 = vrot.lane.b32.xlu0 %v622, 64
    %v728 = vpop.permute.xlu0 %727
    %v730 = vsel %vm201, %v724, %v728
    %v732 = vsel %vm320, %v730, 0
    %734 = vmatprep.subr.mxu0 0.0
    %735 = vmatpush1.msra.mxu0 0.0
    %736 = vmatprep.subr.mxu0 0.0
    %737 = vmatpush1.msra.mxu0 0.0
    %738 = vmatprep.subr.mxu0 0.0
    %739 = vmatpush1.msra.mxu0 0.0
    %740 = vmatprep.subr.mxu0 0.0
    %741 = vmatpush1.msra.mxu0 0.0
    %742 = vmatprep.subr.mxu0 0.0
    %743 = vmatpush1.msra.mxu0 0.0
    %744 = vmatprep.subr.mxu0 0.0
    %745 = vmatpush1.msra.mxu0 0.0
    %746 = vmatprep.subr.mxu0 0.0
    %747 = vmatpush1.msra.mxu0 0.0
    %748 = vmatprep.subr.mxu0 0.0
    %749 = vmatpush1.msra.mxu0 0.0
    %750 = vmatprep.subr.mxu0 0.0
    %751 = vmatpush1.msra.mxu0 %v312
    %752 = vmatprep.subr.mxu0 0.0
    %753 = vmatpush1.msra.mxu0 %v311
    %754 = vmatprep.subr.mxu0 0.0
    %755 = vmatpush1.msra.mxu0 %v310
    %756 = vmatprep.subr.mxu0 0.0
    %757 = vmatpush1.msra.mxu0 %v309
    %758 = vmatprep.subr.mxu0 0.0
    %759 = vmatpush1.msra.mxu0 %v308
    %760 = vmatprep.subr.mxu0 0.0
    %761 = vmatpush1.msra.mxu0 %v307
    %762 = vmatprep.subr.mxu0 0.0
    %763 = vmatpush1.msra.mxu0 %v306
    %764 = vmatprep.subr.mxu0 0.0
    %765 = vmatpush1.msra.mxu0 %v305
    %766 = vmatprep.subr.mxu0 0.0
    %767 = vmatpush2.msra.mxu0 0.0
    %768 = vmatprep.subr.mxu0 0.0
    %769 = vmatpush2.msra.mxu0 0.0
    %770 = vmatprep.subr.mxu0 0.0
    %771 = vmatpush2.msra.mxu0 0.0
    %772 = vmatprep.subr.mxu0 0.0
    %773 = vmatpush2.msra.mxu0 0.0
    %774 = vmatprep.subr.mxu0 0.0
    %775 = vmatpush2.msra.mxu0 0.0
    %776 = vmatprep.subr.mxu0 0.0
    %777 = vmatpush2.msra.mxu0 0.0
    %778 = vmatprep.subr.mxu0 0.0
    %779 = vmatpush2.msra.mxu0 0.0
    %780 = vmatprep.subr.mxu0 0.0
    %781 = vmatpush2.msra.mxu0 0.0
    %782 = vmatprep.subr.mxu0 0.0
    %783 = vmatpush2.msra.mxu0 0.0
    %784 = vmatprep.subr.mxu0 0.0
    %785 = vmatpush2.msra.mxu0 0.0
    %786 = vmatprep.subr.mxu0 0.0
    %787 = vmatpush2.msra.mxu0 0.0
    %788 = vmatprep.subr.mxu0 0.0
    %789 = vmatpush2.msra.mxu0 0.0
    %790 = vmatprep.subr.mxu0 0.0
    %791 = vmatpush2.msra.mxu0 0.0
    %792 = vmatprep.subr.mxu0 0.0
    %793 = vmatpush2.msra.mxu0 0.0
    %794 = vmatprep.subr.mxu0 0.0
    %795 = vmatpush2.msra.mxu0 0.0
    %796 = vmatprep.subr.mxu0 0.0
    %797 = vmatpush2.msra.mxu0 0.0
    %798 = vmatprep.mubr.f32.mxu0 0.0
    %799 = vmatmul.mubr.f32.gmra.mxu0 %v732
    %v800 = vpop.f32.mrf.mxu0
    %v801 = vadd.f32 %v318, %v800
    %v802 = vpop.f32.mrf.mxu0
    %803 = vdwg.mxu0
    %v804 = vxor.u32 %v801, 2147483648
    %v805 = vmul.f32 %v804, 1.442695
    %v806 = vpow.pop %v805
    %v807 = vadd.f32 %v806, 1.0
    %v808 = vrcp.pop %v807
    %v809 = vmul.f32 1.0, %v808
    %v810 = vtanh.pop %v801
    %v811 = vmul.f32 %v809, %v616
    %813 = vrot.lane.b32.xlu0 %v810, 64
    %v814 = vpop.permute.xlu0 %813
    %v816 = vmul.f32 %v809, %v814
    %818 = vrot.lane.b32.xlu0 %v816, 32
    %v819 = vpop.permute.xlu0 %818
    %v821 = vadd.f32 %v811, %v819
    %v822 = vtanh.pop %v821
    %824 = vrot.lane.b32.xlu0 %v822, 64
    %v825 = vpop.permute.xlu0 %824
    %v827 = vmul.f32 %v809, %v825
    %s828 = scalar_lea.vmem [#allocation2], 24
    %v829 = vld [vmem:[%s828] sm:$0xff]
    %v830 = vsel %vm201, %v724, 0
    %832 = vmatprep.subr.mxu0 0.0
    %833 = vmatpush1.msra.mxu0 0.0
    %834 = vmatprep.subr.mxu0 0.0
    %835 = vmatpush1.msra.mxu0 0.0
    %836 = vmatprep.subr.mxu0 0.0
    %837 = vmatpush1.msra.mxu0 0.0
    %838 = vmatprep.subr.mxu0 0.0
    %839 = vmatpush1.msra.mxu0 0.0
    %840 = vmatprep.subr.mxu0 0.0
    %841 = vmatpush1.msra.mxu0 0.0
    %842 = vmatprep.subr.mxu0 0.0
    %843 = vmatpush1.msra.mxu0 0.0
    %844 = vmatprep.subr.mxu0 0.0
    %845 = vmatpush1.msra.mxu0 0.0
    %846 = vmatprep.subr.mxu0 0.0
    %847 = vmatpush1.msra.mxu0 0.0
    %848 = vmatprep.subr.mxu0 0.0
    %849 = vmatpush1.msra.mxu0 0.0
    %850 = vmatprep.subr.mxu0 0.0
    %851 = vmatpush1.msra.mxu0 0.0
    %852 = vmatprep.subr.mxu0 0.0
    %853 = vmatpush1.msra.mxu0 0.0
    %854 = vmatprep.subr.mxu0 0.0
    %855 = vmatpush1.msra.mxu0 0.0
    %856 = vmatprep.subr.mxu0 0.0
    %857 = vmatpush1.msra.mxu0 %v200
    %858 = vmatprep.subr.mxu0 0.0
    %859 = vmatpush1.msra.mxu0 %v199
    %860 = vmatprep.subr.mxu0 0.0
    %861 = vmatpush1.msra.mxu0 %v198
    %862 = vmatprep.subr.mxu0 0.0
    %863 = vmatpush1.msra.mxu0 %v197
    %864 = vmatprep.subr.mxu0 0.0
    %865 = vmatpush2.msra.mxu0 0.0
    %866 = vmatprep.subr.mxu0 0.0
    %867 = vmatpush2.msra.mxu0 0.0
    %868 = vmatprep.subr.mxu0 0.0
    %869 = vmatpush2.msra.mxu0 0.0
    %870 = vmatprep.subr.mxu0 0.0
    %871 = vmatpush2.msra.mxu0 0.0
    %872 = vmatprep.subr.mxu0 0.0
    %873 = vmatpush2.msra.mxu0 0.0
    %874 = vmatprep.subr.mxu0 0.0
    %875 = vmatpush2.msra.mxu0 0.0
    %876 = vmatprep.subr.mxu0 0.0
    %877 = vmatpush2.msra.mxu0 0.0
    %878 = vmatprep.subr.mxu0 0.0
    %879 = vmatpush2.msra.mxu0 0.0
    %880 = vmatprep.subr.mxu0 0.0
    %881 = vmatpush2.msra.mxu0 0.0
    %882 = vmatprep.subr.mxu0 0.0
    %883 = vmatpush2.msra.mxu0 0.0
    %884 = vmatprep.subr.mxu0 0.0
    %885 = vmatpush2.msra.mxu0 0.0
    %886 = vmatprep.subr.mxu0 0.0
    %887 = vmatpush2.msra.mxu0 0.0
    %888 = vmatprep.subr.mxu0 0.0
    %889 = vmatpush2.msra.mxu0 0.0
    %890 = vmatprep.subr.mxu0 0.0
    %891 = vmatpush2.msra.mxu0 0.0
    %892 = vmatprep.subr.mxu0 0.0
    %893 = vmatpush2.msra.mxu0 0.0
    %894 = vmatprep.subr.mxu0 0.0
    %895 = vmatpush2.msra.mxu0 0.0
    %896 = vmatprep.mubr.f32.mxu0 0.0
    %897 = vmatmul.mubr.f32.gmra.mxu0 %v830
    %v898 = vpop.f32.mrf.mxu0
    %v899 = vadd.f32 0.0, %v898
    %v900 = vpop.f32.mrf.mxu0
    %901 = vdwg.mxu0
    %v902 = vadd.f32 %v829, %v899
    %v903 = vxor.u32 %v902, 2147483648
    %v904 = vmul.f32 %v903, 1.442695
    %v905 = vpow.pop %v904
    %v906 = vadd.f32 %v905, 1.0
    %v907 = vrcp.pop %v906
    %v908 = vmul.f32 1.0, %v907
    %v909 = vtanh.pop %v902
    %v910 = vmul.f32 %v908, %v715
    %912 = vrot.lane.b32.xlu0 %v909, 64
    %v913 = vpop.permute.xlu0 %912
    %v915 = vmul.f32 %v908, %v913
    %917 = vrot.lane.b32.xlu0 %v915, 32
    %v918 = vpop.permute.xlu0 %917
    %v920 = vadd.f32 %v910, %v918
    %v921 = vtanh.pop %v920
    %923 = vrot.lane.b32.xlu0 %v921, 64
    %v924 = vpop.permute.xlu0 %923
    %v926 = vmul.f32 %v908, %v924
    %928 = vrot.lane.b32.xlu0 %v926, 32
    %v929 = vpop.permute.xlu0 %928
    %932 = vrot.lane.b32.xlu0 %v827, 64
    %v933 = vpop.permute.xlu0 %932
    %v935 = vsel %vm201, %v929, %v933
    %v937 = vsel %vm320, %v935, 0
    %939 = vmatprep.subr.mxu0 0.0
    %940 = vmatpush1.msra.mxu0 0.0
    %941 = vmatprep.subr.mxu0 0.0
    %942 = vmatpush1.msra.mxu0 0.0
    %943 = vmatprep.subr.mxu0 0.0
    %944 = vmatpush1.msra.mxu0 0.0
    %945 = vmatprep.subr.mxu0 0.0
    %946 = vmatpush1.msra.mxu0 0.0
    %947 = vmatprep.subr.mxu0 0.0
    %948 = vmatpush1.msra.mxu0 0.0
    %949 = vmatprep.subr.mxu0 0.0
    %950 = vmatpush1.msra.mxu0 0.0
    %951 = vmatprep.subr.mxu0 0.0
    %952 = vmatpush1.msra.mxu0 0.0
    %953 = vmatprep.subr.mxu0 0.0
    %954 = vmatpush1.msra.mxu0 0.0
    %955 = vmatprep.subr.mxu0 0.0
    %956 = vmatpush1.msra.mxu0 %v312
    %957 = vmatprep.subr.mxu0 0.0
    %958 = vmatpush1.msra.mxu0 %v311
    %959 = vmatprep.subr.mxu0 0.0
    %960 = vmatpush1.msra.mxu0 %v310
    %961 = vmatprep.subr.mxu0 0.0
    %962 = vmatpush1.msra.mxu0 %v309
    %963 = vmatprep.subr.mxu0 0.0
    %964 = vmatpush1.msra.mxu0 %v308
    %965 = vmatprep.subr.mxu0 0.0
    %966 = vmatpush1.msra.mxu0 %v307
    %967 = vmatprep.subr.mxu0 0.0
    %968 = vmatpush1.msra.mxu0 %v306
    %969 = vmatprep.subr.mxu0 0.0
    %970 = vmatpush1.msra.mxu0 %v305
    %971 = vmatprep.subr.mxu0 0.0
    %972 = vmatpush2.msra.mxu0 0.0
    %973 = vmatprep.subr.mxu0 0.0
    %974 = vmatpush2.msra.mxu0 0.0
    %975 = vmatprep.subr.mxu0 0.0
    %976 = vmatpush2.msra.mxu0 0.0
    %977 = vmatprep.subr.mxu0 0.0
    %978 = vmatpush2.msra.mxu0 0.0
    %979 = vmatprep.subr.mxu0 0.0
    %980 = vmatpush2.msra.mxu0 0.0
    %981 = vmatprep.subr.mxu0 0.0
    %982 = vmatpush2.msra.mxu0 0.0
    %983 = vmatprep.subr.mxu0 0.0
    %984 = vmatpush2.msra.mxu0 0.0
    %985 = vmatprep.subr.mxu0 0.0
    %986 = vmatpush2.msra.mxu0 0.0
    %987 = vmatprep.subr.mxu0 0.0
    %988 = vmatpush2.msra.mxu0 0.0
    %989 = vmatprep.subr.mxu0 0.0
    %990 = vmatpush2.msra.mxu0 0.0
    %991 = vmatprep.subr.mxu0 0.0
    %992 = vmatpush2.msra.mxu0 0.0
    %993 = vmatprep.subr.mxu0 0.0
    %994 = vmatpush2.msra.mxu0 0.0
    %995 = vmatprep.subr.mxu0 0.0
    %996 = vmatpush2.msra.mxu0 0.0
    %997 = vmatprep.subr.mxu0 0.0
    %998 = vmatpush2.msra.mxu0 0.0
    %999 = vmatprep.subr.mxu0 0.0
    %1000 = vmatpush2.msra.mxu0 0.0
    %1001 = vmatprep.subr.mxu0 0.0
    %1002 = vmatpush2.msra.mxu0 0.0
    %1003 = vmatprep.mubr.f32.mxu0 0.0
    %1004 = vmatmul.mubr.f32.gmra.mxu0 %v937
    %v1005 = vpop.f32.mrf.mxu0
    %v1006 = vadd.f32 %v318, %v1005
    %v1007 = vpop.f32.mrf.mxu0
    %1008 = vdwg.mxu0
    %v1009 = vxor.u32 %v1006, 2147483648
    %v1010 = vmul.f32 %v1009, 1.442695
    %v1011 = vpow.pop %v1010
    %v1012 = vadd.f32 %v1011, 1.0
    %v1013 = vrcp.pop %v1012
    %v1014 = vmul.f32 1.0, %v1013
    %v1015 = vtanh.pop %v1006
    %v1016 = vmul.f32 %v1014, %v821
    %1018 = vrot.lane.b32.xlu0 %v1015, 64
    %v1019 = vpop.permute.xlu0 %1018
    %v1021 = vmul.f32 %v1014, %v1019
    %1023 = vrot.lane.b32.xlu0 %v1021, 32
    %v1024 = vpop.permute.xlu0 %1023
    %v1026 = vadd.f32 %v1016, %v1024
    %v1027 = vtanh.pop %v1026
    %1029 = vrot.lane.b32.xlu0 %v1027, 64
    %v1030 = vpop.permute.xlu0 %1029
    %v1032 = vmul.f32 %v1014, %v1030
    %s1033 = scalar_lea.vmem [#allocation2], 32
    %v1034 = vld [vmem:[%s1033] sm:$0xff]
    %v1035 = vsel %vm201, %v929, 0
    %1037 = vmatprep.subr.mxu0 0.0
    %1038 = vmatpush1.msra.mxu0 0.0
    %1039 = vmatprep.subr.mxu0 0.0
    %1040 = vmatpush1.msra.mxu0 0.0
    %1041 = vmatprep.subr.mxu0 0.0
    %1042 = vmatpush1.msra.mxu0 0.0
    %1043 = vmatprep.subr.mxu0 0.0
    %1044 = vmatpush1.msra.mxu0 0.0
    %1045 = vmatprep.subr.mxu0 0.0
    %1046 = vmatpush1.msra.mxu0 0.0
    %1047 = vmatprep.subr.mxu0 0.0
    %1048 = vmatpush1.msra.mxu0 0.0
    %1049 = vmatprep.subr.mxu0 0.0
    %1050 = vmatpush1.msra.mxu0 0.0
    %1051 = vmatprep.subr.mxu0 0.0
    %1052 = vmatpush1.msra.mxu0 0.0
    %1053 = vmatprep.subr.mxu0 0.0
    %1054 = vmatpush1.msra.mxu0 0.0
    %1055 = vmatprep.subr.mxu0 0.0
    %1056 = vmatpush1.msra.mxu0 0.0
    %1057 = vmatprep.subr.mxu0 0.0
    %1058 = vmatpush1.msra.mxu0 0.0
    %1059 = vmatprep.subr.mxu0 0.0
    %1060 = vmatpush1.msra.mxu0 0.0
    %1061 = vmatprep.subr.mxu0 0.0
    %1062 = vmatpush1.msra.mxu0 %v200
    %1063 = vmatprep.subr.mxu0 0.0
    %1064 = vmatpush1.msra.mxu0 %v199
    %1065 = vmatprep.subr.mxu0 0.0
    %1066 = vmatpush1.msra.mxu0 %v198
    %1067 = vmatprep.subr.mxu0 0.0
    %1068 = vmatpush1.msra.mxu0 %v197
    %1069 = vmatprep.subr.mxu0 0.0
    %1070 = vmatpush2.msra.mxu0 0.0
    %1071 = vmatprep.subr.mxu0 0.0
    %1072 = vmatpush2.msra.mxu0 0.0
    %1073 = vmatprep.subr.mxu0 0.0
    %1074 = vmatpush2.msra.mxu0 0.0
    %1075 = vmatprep.subr.mxu0 0.0
    %1076 = vmatpush2.msra.mxu0 0.0
    %1077 = vmatprep.subr.mxu0 0.0
    %1078 = vmatpush2.msra.mxu0 0.0
    %1079 = vmatprep.subr.mxu0 0.0
    %1080 = vmatpush2.msra.mxu0 0.0
    %1081 = vmatprep.subr.mxu0 0.0
    %1082 = vmatpush2.msra.mxu0 0.0
    %1083 = vmatprep.subr.mxu0 0.0
    %1084 = vmatpush2.msra.mxu0 0.0
    %1085 = vmatprep.subr.mxu0 0.0
    %1086 = vmatpush2.msra.mxu0 0.0
    %1087 = vmatprep.subr.mxu0 0.0
    %1088 = vmatpush2.msra.mxu0 0.0
    %1089 = vmatprep.subr.mxu0 0.0
    %1090 = vmatpush2.msra.mxu0 0.0
    %1091 = vmatprep.subr.mxu0 0.0
    %1092 = vmatpush2.msra.mxu0 0.0
    %1093 = vmatprep.subr.mxu0 0.0
    %1094 = vmatpush2.msra.mxu0 0.0
    %1095 = vmatprep.subr.mxu0 0.0
    %1096 = vmatpush2.msra.mxu0 0.0
    %1097 = vmatprep.subr.mxu0 0.0
    %1098 = vmatpush2.msra.mxu0 0.0
    %1099 = vmatprep.subr.mxu0 0.0
    %1100 = vmatpush2.msra.mxu0 0.0
    %1101 = vmatprep.mubr.f32.mxu0 0.0
    %1102 = vmatmul.mubr.f32.gmra.mxu0 %v1035
    %v1103 = vpop.f32.mrf.mxu0
    %v1104 = vadd.f32 0.0, %v1103
    %v1105 = vpop.f32.mrf.mxu0
    %1106 = vdwg.mxu0
    %v1107 = vadd.f32 %v1034, %v1104
    %v1108 = vxor.u32 %v1107, 2147483648
    %v1109 = vmul.f32 %v1108, 1.442695
    %v1110 = vpow.pop %v1109
    %v1111 = vadd.f32 %v1110, 1.0
    %v1112 = vrcp.pop %v1111
    %v1113 = vmul.f32 1.0, %v1112
    %v1114 = vtanh.pop %v1107
    %v1115 = vmul.f32 %v1113, %v920
    %1117 = vrot.lane.b32.xlu0 %v1114, 64
    %v1118 = vpop.permute.xlu0 %1117
    %v1120 = vmul.f32 %v1113, %v1118
    %1122 = vrot.lane.b32.xlu0 %v1120, 32
    %v1123 = vpop.permute.xlu0 %1122
    %v1125 = vadd.f32 %v1115, %v1123
    %v1126 = vtanh.pop %v1125
    %1128 = vrot.lane.b32.xlu0 %v1126, 64
    %v1129 = vpop.permute.xlu0 %1128
    %v1131 = vmul.f32 %v1113, %v1129
    %1133 = vrot.lane.b32.xlu0 %v1131, 32
    %v1134 = vpop.permute.xlu0 %1133
    %1137 = vrot.lane.b32.xlu0 %v1032, 64
    %v1138 = vpop.permute.xlu0 %1137
    %v1140 = vsel %vm201, %v1134, %v1138
    %v1142 = vsel %vm320, %v1140, 0
    %1144 = vmatprep.subr.mxu0 0.0
    %1145 = vmatpush1.msra.mxu0 0.0
    %1146 = vmatprep.subr.mxu0 0.0
    %1147 = vmatpush1.msra.mxu0 0.0
    %1148 = vmatprep.subr.mxu0 0.0
    %1149 = vmatpush1.msra.mxu0 0.0
    %1150 = vmatprep.subr.mxu0 0.0
    %1151 = vmatpush1.msra.mxu0 0.0
    %1152 = vmatprep.subr.mxu0 0.0
    %1153 = vmatpush1.msra.mxu0 0.0
    %1154 = vmatprep.subr.mxu0 0.0
    %1155 = vmatpush1.msra.mxu0 0.0
    %1156 = vmatprep.subr.mxu0 0.0
    %1157 = vmatpush1.msra.mxu0 0.0
    %1158 = vmatprep.subr.mxu0 0.0
    %1159 = vmatpush1.msra.mxu0 0.0
    %1160 = vmatprep.subr.mxu0 0.0
    %1161 = vmatpush1.msra.mxu0 %v312
    %1162 = vmatprep.subr.mxu0 0.0
    %1163 = vmatpush1.msra.mxu0 %v311
    %1164 = vmatprep.subr.mxu0 0.0
    %1165 = vmatpush1.msra.mxu0 %v310
    %1166 = vmatprep.subr.mxu0 0.0
    %1167 = vmatpush1.msra.mxu0 %v309
    %1168 = vmatprep.subr.mxu0 0.0
    %1169 = vmatpush1.msra.mxu0 %v308
    %1170 = vmatprep.subr.mxu0 0.0
    %1171 = vmatpush1.msra.mxu0 %v307
    %1172 = vmatprep.subr.mxu0 0.0
    %1173 = vmatpush1.msra.mxu0 %v306
    %1174 = vmatprep.subr.mxu0 0.0
    %1175 = vmatpush1.msra.mxu0 %v305
    %1176 = vmatprep.subr.mxu0 0.0
    %1177 = vmatpush2.msra.mxu0 0.0
    %1178 = vmatprep.subr.mxu0 0.0
    %1179 = vmatpush2.msra.mxu0 0.0
    %1180 = vmatprep.subr.mxu0 0.0
    %1181 = vmatpush2.msra.mxu0 0.0
    %1182 = vmatprep.subr.mxu0 0.0
    %1183 = vmatpush2.msra.mxu0 0.0
    %1184 = vmatprep.subr.mxu0 0.0
    %1185 = vmatpush2.msra.mxu0 0.0
    %1186 = vmatprep.subr.mxu0 0.0
    %1187 = vmatpush2.msra.mxu0 0.0
    %1188 = vmatprep.subr.mxu0 0.0
    %1189 = vmatpush2.msra.mxu0 0.0
    %1190 = vmatprep.subr.mxu0 0.0
    %1191 = vmatpush2.msra.mxu0 0.0
    %1192 = vmatprep.subr.mxu0 0.0
    %1193 = vmatpush2.msra.mxu0 0.0
    %1194 = vmatprep.subr.mxu0 0.0
    %1195 = vmatpush2.msra.mxu0 0.0
    %1196 = vmatprep.subr.mxu0 0.0
    %1197 = vmatpush2.msra.mxu0 0.0
    %1198 = vmatprep.subr.mxu0 0.0
    %1199 = vmatpush2.msra.mxu0 0.0
    %1200 = vmatprep.subr.mxu0 0.0
    %1201 = vmatpush2.msra.mxu0 0.0
    %1202 = vmatprep.subr.mxu0 0.0
    %1203 = vmatpush2.msra.mxu0 0.0
    %1204 = vmatprep.subr.mxu0 0.0
    %1205 = vmatpush2.msra.mxu0 0.0
    %1206 = vmatprep.subr.mxu0 0.0
    %1207 = vmatpush2.msra.mxu0 0.0
    %1208 = vmatprep.mubr.f32.mxu0 0.0
    %1209 = vmatmul.mubr.f32.gmra.mxu0 %v1142
    %v1210 = vpop.f32.mrf.mxu0
    %v1211 = vadd.f32 %v318, %v1210
    %v1212 = vpop.f32.mrf.mxu0
    %1213 = vdwg.mxu0
    %v1214 = vxor.u32 %v1211, 2147483648
    %v1215 = vmul.f32 %v1214, 1.442695
    %v1216 = vpow.pop %v1215
    %v1217 = vadd.f32 %v1216, 1.0
    %v1218 = vrcp.pop %v1217
    %v1219 = vmul.f32 1.0, %v1218
    %v1220 = vtanh.pop %v1211
    %v1221 = vmul.f32 %v1219, %v1026
    %1223 = vrot.lane.b32.xlu0 %v1220, 64
    %v1224 = vpop.permute.xlu0 %1223
    %v1226 = vmul.f32 %v1219, %v1224
    %1228 = vrot.lane.b32.xlu0 %v1226, 32
    %v1229 = vpop.permute.xlu0 %1228
    %v1231 = vadd.f32 %v1221, %v1229
    %v1232 = vtanh.pop %v1231
    %1234 = vrot.lane.b32.xlu0 %v1232, 64
    %v1235 = vpop.permute.xlu0 %1234
    %v1237 = vmul.f32 %v1219, %v1235
    %s1238 = scalar_lea.vmem [#allocation2], 40
    %v1239 = vld [vmem:[%s1238] sm:$0xff]
    %v1240 = vsel %vm201, %v1134, 0
    %1242 = vmatprep.subr.mxu0 0.0
    %1243 = vmatpush1.msra.mxu0 0.0
    %1244 = vmatprep.subr.mxu0 0.0
    %1245 = vmatpush1.msra.mxu0 0.0
    %1246 = vmatprep.subr.mxu0 0.0
    %1247 = vmatpush1.msra.mxu0 0.0
    %1248 = vmatprep.subr.mxu0 0.0
    %1249 = vmatpush1.msra.mxu0 0.0
    %1250 = vmatprep.subr.mxu0 0.0
    %1251 = vmatpush1.msra.mxu0 0.0
    %1252 = vmatprep.subr.mxu0 0.0
    %1253 = vmatpush1.msra.mxu0 0.0
    %1254 = vmatprep.subr.mxu0 0.0
    %1255 = vmatpush1.msra.mxu0 0.0
    %1256 = vmatprep.subr.mxu0 0.0
    %1257 = vmatpush1.msra.mxu0 0.0
    %1258 = vmatprep.subr.mxu0 0.0
    %1259 = vmatpush1.msra.mxu0 0.0
    %1260 = vmatprep.subr.mxu0 0.0
    %1261 = vmatpush1.msra.mxu0 0.0
    %1262 = vmatprep.subr.mxu0 0.0
    %1263 = vmatpush1.msra.mxu0 0.0
    %1264 = vmatprep.subr.mxu0 0.0
    %1265 = vmatpush1.msra.mxu0 0.0
    %1266 = vmatprep.subr.mxu0 0.0
    %1267 = vmatpush1.msra.mxu0 %v200
    %1268 = vmatprep.subr.mxu0 0.0
    %1269 = vmatpush1.msra.mxu0 %v199
    %1270 = vmatprep.subr.mxu0 0.0
    %1271 = vmatpush1.msra.mxu0 %v198
    %1272 = vmatprep.subr.mxu0 0.0
    %1273 = vmatpush1.msra.mxu0 %v197
    %1274 = vmatprep.subr.mxu0 0.0
    %1275 = vmatpush2.msra.mxu0 0.0
    %1276 = vmatprep.subr.mxu0 0.0
    %1277 = vmatpush2.msra.mxu0 0.0
    %1278 = vmatprep.subr.mxu0 0.0
    %1279 = vmatpush2.msra.mxu0 0.0
    %1280 = vmatprep.subr.mxu0 0.0
    %1281 = vmatpush2.msra.mxu0 0.0
    %1282 = vmatprep.subr.mxu0 0.0
    %1283 = vmatpush2.msra.mxu0 0.0
    %1284 = vmatprep.subr.mxu0 0.0
    %1285 = vmatpush2.msra.mxu0 0.0
    %1286 = vmatprep.subr.mxu0 0.0
    %1287 = vmatpush2.msra.mxu0 0.0
    %1288 = vmatprep.subr.mxu0 0.0
    %1289 = vmatpush2.msra.mxu0 0.0
    %1290 = vmatprep.subr.mxu0 0.0
    %1291 = vmatpush2.msra.mxu0 0.0
    %1292 = vmatprep.subr.mxu0 0.0
    %1293 = vmatpush2.msra.mxu0 0.0
    %1294 = vmatprep.subr.mxu0 0.0
    %1295 = vmatpush2.msra.mxu0 0.0
    %1296 = vmatprep.subr.mxu0 0.0
    %1297 = vmatpush2.msra.mxu0 0.0
    %1298 = vmatprep.subr.mxu0 0.0
    %1299 = vmatpush2.msra.mxu0 0.0
    %1300 = vmatprep.subr.mxu0 0.0
    %1301 = vmatpush2.msra.mxu0 0.0
    %1302 = vmatprep.subr.mxu0 0.0
    %1303 = vmatpush2.msra.mxu0 0.0
    %1304 = vmatprep.subr.mxu0 0.0
    %1305 = vmatpush2.msra.mxu0 0.0
    %1306 = vmatprep.mubr.f32.mxu0 0.0
    %1307 = vmatmul.mubr.f32.gmra.mxu0 %v1240
    %v1308 = vpop.f32.mrf.mxu0
    %v1309 = vadd.f32 0.0, %v1308
    %v1310 = vpop.f32.mrf.mxu0
    %1311 = vdwg.mxu0
    %v1312 = vadd.f32 %v1239, %v1309
    %v1313 = vxor.u32 %v1312, 2147483648
    %v1314 = vmul.f32 %v1313, 1.442695
    %v1315 = vpow.pop %v1314
    %v1316 = vadd.f32 %v1315, 1.0
    %v1317 = vrcp.pop %v1316
    %v1318 = vmul.f32 1.0, %v1317
    %v1319 = vtanh.pop %v1312
    %v1320 = vmul.f32 %v1318, %v1125
    %1322 = vrot.lane.b32.xlu0 %v1319, 64
    %v1323 = vpop.permute.xlu0 %1322
    %v1325 = vmul.f32 %v1318, %v1323
    %1327 = vrot.lane.b32.xlu0 %v1325, 32
    %v1328 = vpop.permute.xlu0 %1327
    %v1330 = vadd.f32 %v1320, %v1328
    %v1331 = vtanh.pop %v1330
    %1333 = vrot.lane.b32.xlu0 %v1331, 64
    %v1334 = vpop.permute.xlu0 %1333
    %v1336 = vmul.f32 %v1318, %v1334
    %1338 = vrot.lane.b32.xlu0 %v1336, 32
    %v1339 = vpop.permute.xlu0 %1338
    %1342 = vrot.lane.b32.xlu0 %v1237, 64
    %v1343 = vpop.permute.xlu0 %1342
    %v1345 = vsel %vm201, %v1339, %v1343
    %v1347 = vsel %vm320, %v1345, 0
    %1349 = vmatprep.subr.mxu0 0.0
    %1350 = vmatpush1.msra.mxu0 0.0
    %1351 = vmatprep.subr.mxu0 0.0
    %1352 = vmatpush1.msra.mxu0 0.0
    %1353 = vmatprep.subr.mxu0 0.0
    %1354 = vmatpush1.msra.mxu0 0.0
    %1355 = vmatprep.subr.mxu0 0.0
    %1356 = vmatpush1.msra.mxu0 0.0
    %1357 = vmatprep.subr.mxu0 0.0
    %1358 = vmatpush1.msra.mxu0 0.0
    %1359 = vmatprep.subr.mxu0 0.0
    %1360 = vmatpush1.msra.mxu0 0.0
    %1361 = vmatprep.subr.mxu0 0.0
    %1362 = vmatpush1.msra.mxu0 0.0
    %1363 = vmatprep.subr.mxu0 0.0
    %1364 = vmatpush1.msra.mxu0 0.0
    %1365 = vmatprep.subr.mxu0 0.0
    %1366 = vmatpush1.msra.mxu0 %v312
    %1367 = vmatprep.subr.mxu0 0.0
    %1368 = vmatpush1.msra.mxu0 %v311
    %1369 = vmatprep.subr.mxu0 0.0
    %1370 = vmatpush1.msra.mxu0 %v310
    %1371 = vmatprep.subr.mxu0 0.0
    %1372 = vmatpush1.msra.mxu0 %v309
    %1373 = vmatprep.subr.mxu0 0.0
    %1374 = vmatpush1.msra.mxu0 %v308
    %1375 = vmatprep.subr.mxu0 0.0
    %1376 = vmatpush1.msra.mxu0 %v307
    %1377 = vmatprep.subr.mxu0 0.0
    %1378 = vmatpush1.msra.mxu0 %v306
    %1379 = vmatprep.subr.mxu0 0.0
    %1380 = vmatpush1.msra.mxu0 %v305
    %1381 = vmatprep.subr.mxu0 0.0
    %1382 = vmatpush2.msra.mxu0 0.0
    %1383 = vmatprep.subr.mxu0 0.0
    %1384 = vmatpush2.msra.mxu0 0.0
    %1385 = vmatprep.subr.mxu0 0.0
    %1386 = vmatpush2.msra.mxu0 0.0
    %1387 = vmatprep.subr.mxu0 0.0
    %1388 = vmatpush2.msra.mxu0 0.0
    %1389 = vmatprep.subr.mxu0 0.0
    %1390 = vmatpush2.msra.mxu0 0.0
    %1391 = vmatprep.subr.mxu0 0.0
    %1392 = vmatpush2.msra.mxu0 0.0
    %1393 = vmatprep.subr.mxu0 0.0
    %1394 = vmatpush2.msra.mxu0 0.0
    %1395 = vmatprep.subr.mxu0 0.0
    %1396 = vmatpush2.msra.mxu0 0.0
    %1397 = vmatprep.subr.mxu0 0.0
    %1398 = vmatpush2.msra.mxu0 0.0
    %1399 = vmatprep.subr.mxu0 0.0
    %1400 = vmatpush2.msra.mxu0 0.0
    %1401 = vmatprep.subr.mxu0 0.0
    %1402 = vmatpush2.msra.mxu0 0.0
    %1403 = vmatprep.subr.mxu0 0.0
    %1404 = vmatpush2.msra.mxu0 0.0
    %1405 = vmatprep.subr.mxu0 0.0
    %1406 = vmatpush2.msra.mxu0 0.0
    %1407 = vmatprep.subr.mxu0 0.0
    %1408 = vmatpush2.msra.mxu0 0.0
    %1409 = vmatprep.subr.mxu0 0.0
    %1410 = vmatpush2.msra.mxu0 0.0
    %1411 = vmatprep.subr.mxu0 0.0
    %1412 = vmatpush2.msra.mxu0 0.0
    %1413 = vmatprep.mubr.f32.mxu0 0.0
    %1414 = vmatmul.mubr.f32.gmra.mxu0 %v1347
    %v1415 = vpop.f32.mrf.mxu0
    %v1416 = vadd.f32 %v318, %v1415
    %v1417 = vpop.f32.mrf.mxu0
    %1418 = vdwg.mxu0
    %v1419 = vxor.u32 %v1416, 2147483648
    %v1420 = vmul.f32 %v1419, 1.442695
    %v1421 = vpow.pop %v1420
    %v1422 = vadd.f32 %v1421, 1.0
    %v1423 = vrcp.pop %v1422
    %v1424 = vmul.f32 1.0, %v1423
    %v1425 = vtanh.pop %v1416
    %v1426 = vmul.f32 %v1424, %v1231
    %1428 = vrot.lane.b32.xlu0 %v1425, 64
    %v1429 = vpop.permute.xlu0 %1428
    %v1431 = vmul.f32 %v1424, %v1429
    %1433 = vrot.lane.b32.xlu0 %v1431, 32
    %v1434 = vpop.permute.xlu0 %1433
    %v1436 = vadd.f32 %v1426, %v1434
    %v1437 = vtanh.pop %v1436
    %1439 = vrot.lane.b32.xlu0 %v1437, 64
    %v1440 = vpop.permute.xlu0 %1439
    %v1442 = vmul.f32 %v1424, %v1440
    %s1443 = scalar_lea.vmem [#allocation2], 48
    %v1444 = vld [vmem:[%s1443] sm:$0xff]
    %v1445 = vsel %vm201, %v1339, 0
    %1447 = vmatprep.subr.mxu0 0.0
    %1448 = vmatpush1.msra.mxu0 0.0
    %1449 = vmatprep.subr.mxu0 0.0
    %1450 = vmatpush1.msra.mxu0 0.0
    %1451 = vmatprep.subr.mxu0 0.0
    %1452 = vmatpush1.msra.mxu0 0.0
    %1453 = vmatprep.subr.mxu0 0.0
    %1454 = vmatpush1.msra.mxu0 0.0
    %1455 = vmatprep.subr.mxu0 0.0
    %1456 = vmatpush1.msra.mxu0 0.0
    %1457 = vmatprep.subr.mxu0 0.0
    %1458 = vmatpush1.msra.mxu0 0.0
    %1459 = vmatprep.subr.mxu0 0.0
    %1460 = vmatpush1.msra.mxu0 0.0
    %1461 = vmatprep.subr.mxu0 0.0
    %1462 = vmatpush1.msra.mxu0 0.0
    %1463 = vmatprep.subr.mxu0 0.0
    %1464 = vmatpush1.msra.mxu0 0.0
    %1465 = vmatprep.subr.mxu0 0.0
    %1466 = vmatpush1.msra.mxu0 0.0
    %1467 = vmatprep.subr.mxu0 0.0
    %1468 = vmatpush1.msra.mxu0 0.0
    %1469 = vmatprep.subr.mxu0 0.0
    %1470 = vmatpush1.msra.mxu0 0.0
    %1471 = vmatprep.subr.mxu0 0.0
    %1472 = vmatpush1.msra.mxu0 %v200
    %1473 = vmatprep.subr.mxu0 0.0
    %1474 = vmatpush1.msra.mxu0 %v199
    %1475 = vmatprep.subr.mxu0 0.0
    %1476 = vmatpush1.msra.mxu0 %v198
    %1477 = vmatprep.subr.mxu0 0.0
    %1478 = vmatpush1.msra.mxu0 %v197
    %1479 = vmatprep.subr.mxu0 0.0
    %1480 = vmatpush2.msra.mxu0 0.0
    %1481 = vmatprep.subr.mxu0 0.0
    %1482 = vmatpush2.msra.mxu0 0.0
    %1483 = vmatprep.subr.mxu0 0.0
    %1484 = vmatpush2.msra.mxu0 0.0
    %1485 = vmatprep.subr.mxu0 0.0
    %1486 = vmatpush2.msra.mxu0 0.0
    %1487 = vmatprep.subr.mxu0 0.0
    %1488 = vmatpush2.msra.mxu0 0.0
    %1489 = vmatprep.subr.mxu0 0.0
    %1490 = vmatpush2.msra.mxu0 0.0
    %1491 = vmatprep.subr.mxu0 0.0
    %1492 = vmatpush2.msra.mxu0 0.0
    %1493 = vmatprep.subr.mxu0 0.0
    %1494 = vmatpush2.msra.mxu0 0.0
    %1495 = vmatprep.subr.mxu0 0.0
    %1496 = vmatpush2.msra.mxu0 0.0
    %1497 = vmatprep.subr.mxu0 0.0
    %1498 = vmatpush2.msra.mxu0 0.0
    %1499 = vmatprep.subr.mxu0 0.0
    %1500 = vmatpush2.msra.mxu0 0.0
    %1501 = vmatprep.subr.mxu0 0.0
    %1502 = vmatpush2.msra.mxu0 0.0
    %1503 = vmatprep.subr.mxu0 0.0
    %1504 = vmatpush2.msra.mxu0 0.0
    %1505 = vmatprep.subr.mxu0 0.0
    %1506 = vmatpush2.msra.mxu0 0.0
    %1507 = vmatprep.subr.mxu0 0.0
    %1508 = vmatpush2.msra.mxu0 0.0
    %1509 = vmatprep.subr.mxu0 0.0
    %1510 = vmatpush2.msra.mxu0 0.0
    %1511 = vmatprep.mubr.f32.mxu0 0.0
    %1512 = vmatmul.mubr.f32.gmra.mxu0 %v1445
    %v1513 = vpop.f32.mrf.mxu0
    %v1514 = vadd.f32 0.0, %v1513
    %v1515 = vpop.f32.mrf.mxu0
    %1516 = vdwg.mxu0
    %v1517 = vadd.f32 %v1444, %v1514
    %v1518 = vxor.u32 %v1517, 2147483648
    %v1519 = vmul.f32 %v1518, 1.442695
    %v1520 = vpow.pop %v1519
    %v1521 = vadd.f32 %v1520, 1.0
    %v1522 = vrcp.pop %v1521
    %v1523 = vmul.f32 1.0, %v1522
    %v1524 = vtanh.pop %v1517
    %v1525 = vmul.f32 %v1523, %v1330
    %1527 = vrot.lane.b32.xlu0 %v1524, 64
    %v1528 = vpop.permute.xlu0 %1527
    %v1530 = vmul.f32 %v1523, %v1528
    %1532 = vrot.lane.b32.xlu0 %v1530, 32
    %v1533 = vpop.permute.xlu0 %1532
    %v1535 = vadd.f32 %v1525, %v1533
    %v1536 = vtanh.pop %v1535
    %1538 = vrot.lane.b32.xlu0 %v1536, 64
    %v1539 = vpop.permute.xlu0 %1538
    %v1541 = vmul.f32 %v1523, %v1539
    %1543 = vrot.lane.b32.xlu0 %v1541, 32
    %v1544 = vpop.permute.xlu0 %1543
    %1547 = vrot.lane.b32.xlu0 %v1442, 64
    %v1548 = vpop.permute.xlu0 %1547
    %v1550 = vsel %vm201, %v1544, %v1548
    %v1552 = vsel %vm320, %v1550, 0
    %1554 = vmatprep.subr.mxu0 0.0
    %1555 = vmatpush1.msra.mxu0 0.0
    %1556 = vmatprep.subr.mxu0 0.0
    %1557 = vmatpush1.msra.mxu0 0.0
    %1558 = vmatprep.subr.mxu0 0.0
    %1559 = vmatpush1.msra.mxu0 0.0
    %1560 = vmatprep.subr.mxu0 0.0
    %1561 = vmatpush1.msra.mxu0 0.0
    %1562 = vmatprep.subr.mxu0 0.0
    %1563 = vmatpush1.msra.mxu0 0.0
    %1564 = vmatprep.subr.mxu0 0.0
    %1565 = vmatpush1.msra.mxu0 0.0
    %1566 = vmatprep.subr.mxu0 0.0
    %1567 = vmatpush1.msra.mxu0 0.0
    %1568 = vmatprep.subr.mxu0 0.0
    %1569 = vmatpush1.msra.mxu0 0.0
    %1570 = vmatprep.subr.mxu0 0.0
    %1571 = vmatpush1.msra.mxu0 %v312
    %1572 = vmatprep.subr.mxu0 0.0
    %1573 = vmatpush1.msra.mxu0 %v311
    %1574 = vmatprep.subr.mxu0 0.0
    %1575 = vmatpush1.msra.mxu0 %v310
    %1576 = vmatprep.subr.mxu0 0.0
    %1577 = vmatpush1.msra.mxu0 %v309
    %1578 = vmatprep.subr.mxu0 0.0
    %1579 = vmatpush1.msra.mxu0 %v308
    %1580 = vmatprep.subr.mxu0 0.0
    %1581 = vmatpush1.msra.mxu0 %v307
    %1582 = vmatprep.subr.mxu0 0.0
    %1583 = vmatpush1.msra.mxu0 %v306
    %1584 = vmatprep.subr.mxu0 0.0
    %1585 = vmatpush1.msra.mxu0 %v305
    %1586 = vmatprep.subr.mxu0 0.0
    %1587 = vmatpush2.msra.mxu0 0.0
    %1588 = vmatprep.subr.mxu0 0.0
    %1589 = vmatpush2.msra.mxu0 0.0
    %1590 = vmatprep.subr.mxu0 0.0
    %1591 = vmatpush2.msra.mxu0 0.0
    %1592 = vmatprep.subr.mxu0 0.0
    %1593 = vmatpush2.msra.mxu0 0.0
    %1594 = vmatprep.subr.mxu0 0.0
    %1595 = vmatpush2.msra.mxu0 0.0
    %1596 = vmatprep.subr.mxu0 0.0
    %1597 = vmatpush2.msra.mxu0 0.0
    %1598 = vmatprep.subr.mxu0 0.0
    %1599 = vmatpush2.msra.mxu0 0.0
    %1600 = vmatprep.subr.mxu0 0.0
    %1601 = vmatpush2.msra.mxu0 0.0
    %1602 = vmatprep.subr.mxu0 0.0
    %1603 = vmatpush2.msra.mxu0 0.0
    %1604 = vmatprep.subr.mxu0 0.0
    %1605 = vmatpush2.msra.mxu0 0.0
    %1606 = vmatprep.subr.mxu0 0.0
    %1607 = vmatpush2.msra.mxu0 0.0
    %1608 = vmatprep.subr.mxu0 0.0
    %1609 = vmatpush2.msra.mxu0 0.0
    %1610 = vmatprep.subr.mxu0 0.0
    %1611 = vmatpush2.msra.mxu0 0.0
    %1612 = vmatprep.subr.mxu0 0.0
    %1613 = vmatpush2.msra.mxu0 0.0
    %1614 = vmatprep.subr.mxu0 0.0
    %1615 = vmatpush2.msra.mxu0 0.0
    %1616 = vmatprep.subr.mxu0 0.0
    %1617 = vmatpush2.msra.mxu0 0.0
    %1618 = vmatprep.mubr.f32.mxu0 0.0
    %1619 = vmatmul.mubr.f32.gmra.mxu0 %v1552
    %v1620 = vpop.f32.mrf.mxu0
    %v1621 = vadd.f32 %v318, %v1620
    %v1622 = vpop.f32.mrf.mxu0
    %1623 = vdwg.mxu0
    %v1624 = vxor.u32 %v1621, 2147483648
    %v1625 = vmul.f32 %v1624, 1.442695
    %v1626 = vpow.pop %v1625
    %v1627 = vadd.f32 %v1626, 1.0
    %v1628 = vrcp.pop %v1627
    %v1629 = vmul.f32 1.0, %v1628
    %v1630 = vtanh.pop %v1621
    %v1631 = vmul.f32 %v1629, %v1436
    %1633 = vrot.lane.b32.xlu0 %v1630, 64
    %v1634 = vpop.permute.xlu0 %1633
    %v1636 = vmul.f32 %v1629, %v1634
    %1638 = vrot.lane.b32.xlu0 %v1636, 32
    %v1639 = vpop.permute.xlu0 %1638
    %v1641 = vadd.f32 %v1631, %v1639
    %v1642 = vtanh.pop %v1641
    %1644 = vrot.lane.b32.xlu0 %v1642, 64
    %v1645 = vpop.permute.xlu0 %1644
    %v1647 = vmul.f32 %v1629, %v1645
    %s1648 = scalar_lea.vmem [#allocation2], 56
    %v1649 = vld [vmem:[%s1648] sm:$0xff]
    %v1650 = vsel %vm201, %v1544, 0
    %1652 = vmatprep.subr.mxu0 0.0
    %1653 = vmatpush1.msra.mxu0 0.0
    %1654 = vmatprep.subr.mxu0 0.0
    %1655 = vmatpush1.msra.mxu0 0.0
    %1656 = vmatprep.subr.mxu0 0.0
    %1657 = vmatpush1.msra.mxu0 0.0
    %1658 = vmatprep.subr.mxu0 0.0
    %1659 = vmatpush1.msra.mxu0 0.0
    %1660 = vmatprep.subr.mxu0 0.0
    %1661 = vmatpush1.msra.mxu0 0.0
    %1662 = vmatprep.subr.mxu0 0.0
    %1663 = vmatpush1.msra.mxu0 0.0
    %1664 = vmatprep.subr.mxu0 0.0
    %1665 = vmatpush1.msra.mxu0 0.0
    %1666 = vmatprep.subr.mxu0 0.0
    %1667 = vmatpush1.msra.mxu0 0.0
    %1668 = vmatprep.subr.mxu0 0.0
    %1669 = vmatpush1.msra.mxu0 0.0
    %1670 = vmatprep.subr.mxu0 0.0
    %1671 = vmatpush1.msra.mxu0 0.0
    %1672 = vmatprep.subr.mxu0 0.0
    %1673 = vmatpush1.msra.mxu0 0.0
    %1674 = vmatprep.subr.mxu0 0.0
    %1675 = vmatpush1.msra.mxu0 0.0
    %1676 = vmatprep.subr.mxu0 0.0
    %1677 = vmatpush1.msra.mxu0 %v200
    %1678 = vmatprep.subr.mxu0 0.0
    %1679 = vmatpush1.msra.mxu0 %v199
    %1680 = vmatprep.subr.mxu0 0.0
    %1681 = vmatpush1.msra.mxu0 %v198
    %1682 = vmatprep.subr.mxu0 0.0
    %1683 = vmatpush1.msra.mxu0 %v197
    %1684 = vmatprep.subr.mxu0 0.0
    %1685 = vmatpush2.msra.mxu0 0.0
    %1686 = vmatprep.subr.mxu0 0.0
    %1687 = vmatpush2.msra.mxu0 0.0
    %1688 = vmatprep.subr.mxu0 0.0
    %1689 = vmatpush2.msra.mxu0 0.0
    %1690 = vmatprep.subr.mxu0 0.0
    %1691 = vmatpush2.msra.mxu0 0.0
    %1692 = vmatprep.subr.mxu0 0.0
    %1693 = vmatpush2.msra.mxu0 0.0
    %1694 = vmatprep.subr.mxu0 0.0
    %1695 = vmatpush2.msra.mxu0 0.0
    %1696 = vmatprep.subr.mxu0 0.0
    %1697 = vmatpush2.msra.mxu0 0.0
    %1698 = vmatprep.subr.mxu0 0.0
    %1699 = vmatpush2.msra.mxu0 0.0
    %1700 = vmatprep.subr.mxu0 0.0
    %1701 = vmatpush2.msra.mxu0 0.0
    %1702 = vmatprep.subr.mxu0 0.0
    %1703 = vmatpush2.msra.mxu0 0.0
    %1704 = vmatprep.subr.mxu0 0.0
    %1705 = vmatpush2.msra.mxu0 0.0
    %1706 = vmatprep.subr.mxu0 0.0
    %1707 = vmatpush2.msra.mxu0 0.0
    %1708 = vmatprep.subr.mxu0 0.0
    %1709 = vmatpush2.msra.mxu0 0.0
    %1710 = vmatprep.subr.mxu0 0.0
    %1711 = vmatpush2.msra.mxu0 0.0
    %1712 = vmatprep.subr.mxu0 0.0
    %1713 = vmatpush2.msra.mxu0 0.0
    %1714 = vmatprep.subr.mxu0 0.0
    %1715 = vmatpush2.msra.mxu0 0.0
    %1716 = vmatprep.mubr.f32.mxu0 0.0
    %1717 = vmatmul.mubr.f32.gmra.mxu0 %v1650
    %v1718 = vpop.f32.mrf.mxu0
    %v1719 = vadd.f32 0.0, %v1718
    %v1720 = vpop.f32.mrf.mxu0
    %1721 = vdwg.mxu0
    %v1722 = vadd.f32 %v1649, %v1719
    %v1723 = vxor.u32 %v1722, 2147483648
    %v1724 = vmul.f32 %v1723, 1.442695
    %v1725 = vpow.pop %v1724
    %v1726 = vadd.f32 %v1725, 1.0
    %v1727 = vrcp.pop %v1726
    %v1728 = vmul.f32 1.0, %v1727
    %v1729 = vtanh.pop %v1722
    %v1730 = vmul.f32 %v1728, %v1535
    %1732 = vrot.lane.b32.xlu0 %v1729, 64
    %v1733 = vpop.permute.xlu0 %1732
    %v1735 = vmul.f32 %v1728, %v1733
    %1737 = vrot.lane.b32.xlu0 %v1735, 32
    %v1738 = vpop.permute.xlu0 %1737
    %v1740 = vadd.f32 %v1730, %v1738
    %v1741 = vtanh.pop %v1740
    %1743 = vrot.lane.b32.xlu0 %v1741, 64
    %v1744 = vpop.permute.xlu0 %1743
    %v1746 = vmul.f32 %v1728, %v1744
    %1748 = vrot.lane.b32.xlu0 %v1746, 32
    %v1749 = vpop.permute.xlu0 %1748
    %1752 = vrot.lane.b32.xlu0 %v1647, 64
    %v1753 = vpop.permute.xlu0 %1752
    %v1755 = vsel %vm201, %v1749, %v1753
    %v1757 = vsel %vm320, %v1755, 0
    %1759 = vmatprep.subr.mxu0 0.0
    %1760 = vmatpush1.msra.mxu0 0.0
    %1761 = vmatprep.subr.mxu0 0.0
    %1762 = vmatpush1.msra.mxu0 0.0
    %1763 = vmatprep.subr.mxu0 0.0
    %1764 = vmatpush1.msra.mxu0 0.0
    %1765 = vmatprep.subr.mxu0 0.0
    %1766 = vmatpush1.msra.mxu0 0.0
    %1767 = vmatprep.subr.mxu0 0.0
    %1768 = vmatpush1.msra.mxu0 0.0
    %1769 = vmatprep.subr.mxu0 0.0
    %1770 = vmatpush1.msra.mxu0 0.0
    %1771 = vmatprep.subr.mxu0 0.0
    %1772 = vmatpush1.msra.mxu0 0.0
    %1773 = vmatprep.subr.mxu0 0.0
    %1774 = vmatpush1.msra.mxu0 0.0
    %1775 = vmatprep.subr.mxu0 0.0
    %1776 = vmatpush1.msra.mxu0 %v312
    %1777 = vmatprep.subr.mxu0 0.0
    %1778 = vmatpush1.msra.mxu0 %v311
    %1779 = vmatprep.subr.mxu0 0.0
    %1780 = vmatpush1.msra.mxu0 %v310
    %1781 = vmatprep.subr.mxu0 0.0
    %1782 = vmatpush1.msra.mxu0 %v309
    %1783 = vmatprep.subr.mxu0 0.0
    %1784 = vmatpush1.msra.mxu0 %v308
    %1785 = vmatprep.subr.mxu0 0.0
    %1786 = vmatpush1.msra.mxu0 %v307
    %1787 = vmatprep.subr.mxu0 0.0
    %1788 = vmatpush1.msra.mxu0 %v306
    %1789 = vmatprep.subr.mxu0 0.0
    %1790 = vmatpush1.msra.mxu0 %v305
    %1791 = vmatprep.subr.mxu0 0.0
    %1792 = vmatpush2.msra.mxu0 0.0
    %1793 = vmatprep.subr.mxu0 0.0
    %1794 = vmatpush2.msra.mxu0 0.0
    %1795 = vmatprep.subr.mxu0 0.0
    %1796 = vmatpush2.msra.mxu0 0.0
    %1797 = vmatprep.subr.mxu0 0.0
    %1798 = vmatpush2.msra.mxu0 0.0
    %1799 = vmatprep.subr.mxu0 0.0
    %1800 = vmatpush2.msra.mxu0 0.0
    %1801 = vmatprep.subr.mxu0 0.0
    %1802 = vmatpush2.msra.mxu0 0.0
    %1803 = vmatprep.subr.mxu0 0.0
    %1804 = vmatpush2.msra.mxu0 0.0
    %1805 = vmatprep.subr.mxu0 0.0
    %1806 = vmatpush2.msra.mxu0 0.0
    %1807 = vmatprep.subr.mxu0 0.0
    %1808 = vmatpush2.msra.mxu0 0.0
    %1809 = vmatprep.subr.mxu0 0.0
    %1810 = vmatpush2.msra.mxu0 0.0
    %1811 = vmatprep.subr.mxu0 0.0
    %1812 = vmatpush2.msra.mxu0 0.0
    %1813 = vmatprep.subr.mxu0 0.0
    %1814 = vmatpush2.msra.mxu0 0.0
    %1815 = vmatprep.subr.mxu0 0.0
    %1816 = vmatpush2.msra.mxu0 0.0
    %1817 = vmatprep.subr.mxu0 0.0
    %1818 = vmatpush2.msra.mxu0 0.0
    %1819 = vmatprep.subr.mxu0 0.0
    %1820 = vmatpush2.msra.mxu0 0.0
    %1821 = vmatprep.subr.mxu0 0.0
    %1822 = vmatpush2.msra.mxu0 0.0
    %1823 = vmatprep.mubr.f32.mxu0 0.0
    %1824 = vmatmul.mubr.f32.gmra.mxu0 %v1757
    %v1825 = vpop.f32.mrf.mxu0
    %v1826 = vadd.f32 %v318, %v1825
    %v1827 = vpop.f32.mrf.mxu0
    %1828 = vdwg.mxu0
    %v1829 = vxor.u32 %v1826, 2147483648
    %v1830 = vmul.f32 %v1829, 1.442695
    %v1831 = vpow.pop %v1830
    %v1832 = vadd.f32 %v1831, 1.0
    %v1833 = vrcp.pop %v1832
    %v1834 = vmul.f32 1.0, %v1833
    %v1835 = vtanh.pop %v1826
    %v1836 = vmul.f32 %v1834, %v1641
    %1838 = vrot.lane.b32.xlu0 %v1835, 64
    %v1839 = vpop.permute.xlu0 %1838
    %v1841 = vmul.f32 %v1834, %v1839
    %1843 = vrot.lane.b32.xlu0 %v1841, 32
    %v1844 = vpop.permute.xlu0 %1843
    %v1846 = vadd.f32 %v1836, %v1844
    %v1847 = vtanh.pop %v1846
    %1849 = vrot.lane.b32.xlu0 %v1847, 64
    %v1850 = vpop.permute.xlu0 %1849
    %v1852 = vmul.f32 %v1834, %v1850
    %1854 = vrot.lane.b32.xlu0 %v1852, 32
    %v1855 = vpop.permute.xlu0 %1854
    %1857 = vst.msk [vmem:[#allocation6] sm:$0xff] %vm201, %v1749
    %1858 = vst.msk [vmem:[#allocation6 + $0x8] sm:$0xff] %vm201, %v1855
    %1861 = vrot.lane.b32.xlu0 %v1740, 96
    %v1862 = vpop.permute.xlu0 %1861
    %1863 = vrot.lane.b32.xlu0 %v1846, 96
    %v1864 = vpop.permute.xlu0 %1863
    %1867 = vst.msk [vmem:[#allocation7] sm:$0xff] %vm201, %v1862
    %1868 = vst.msk [vmem:[#allocation7 + $0x8] sm:$0xff] %vm201, %v1864
    // Predicated region
    $region30: #{tpu_custom_call.1} parent=1 // pred_check
      _
    $region31: #{tpu_custom_call.1} parent=1 // pred_check_branch
      %1870 = sbr.rel (0) target = $region33
    $region32: #{tpu_custom_call.1} parent=1 // pred_region
      %s1872 = ssub.s32 256, 256
      %1873 = vsyncadd [#allocation5], %s1872
      %s1874 = sshll.u32 [#allocation6], 4
      %s1875 = int_to_ptr.vmem [resolvable:$true] %s1874
      %1880 = dma.vmem_to_hbm [thread:$0]  %s1875, 256, %s6, [#allocation5], 128, 128, 8
    $region33: #{tpu_custom_call.1} parent=1 // pred_fallthru
      _
    // Predicated region
    $region34: #{tpu_custom_call.1} parent=1 // pred_check
      _
    $region35: #{tpu_custom_call.1} parent=1 // pred_check_branch
      %1882 = sbr.rel (0) target = $region37
    $region36: #{tpu_custom_call.1} parent=1 // pred_region
      %s1884 = ssub.s32 256, 256
      %1885 = vsyncadd [#allocation8], %s1884
      %s1886 = sshll.u32 [#allocation7], 4
      %s1887 = int_to_ptr.vmem [resolvable:$true] %s1886
      %1892 = dma.vmem_to_hbm [thread:$0]  %s1887, 256, %s7, [#allocation8], 128, 128, 8
    $region37: #{tpu_custom_call.1} parent=1 // pred_fallthru
      _
    // Predicated region
    $region38: #{tpu_custom_call.1} parent=1 // pred_check
      _
    $region39: #{tpu_custom_call.1} parent=1 // pred_check_branch
      %1894 = sbr.rel (0) target = $region41
    $region40: #{tpu_custom_call.1} parent=1 // pred_region
      %1895 = dma.done [#allocation5], 256
    $region41: #{tpu_custom_call.1} parent=1 // pred_fallthru
      _
    // Predicated region
    $region42: #{tpu_custom_call.1} parent=1 // pred_check
      _
    $region43: #{tpu_custom_call.1} parent=1 // pred_check_branch
      %1897 = sbr.rel (0) target = $region45
    $region44: #{tpu_custom_call.1} parent=1 // pred_region
      %1898 = dma.done [#allocation8], 256
    $region45: #{tpu_custom_call.1} parent=1 // pred_fallthru
      _
    %1899 = vsyncpa [#allocation4], 1
    %1900 = vsyncpa [#allocation5], 1
    %1901 = vsyncpa [#allocation8], 1

</llo_original>
